<compile_context>
chip_gen: v7x
topology: tpu7x:2x2x1
jax: 0.10.0
libtpu: 0.0.40
codegen_flags: <defaults>
</compile_context>

<pallas_src>
import numpy as np
import jax
import jax.numpy as jnp
from jax import lax
from jax.experimental import pallas as pl
from jax.experimental.pallas import tpu as pltpu


# --------------------------------------------------------------------------
# helpers
# --------------------------------------------------------------------------
def _out_size(size, ksize=3, stride=2, pad=1):
    return (size + 2 * pad - ksize) // stride + 1


def _pool_matrix(size, out_size, ksize=3, stride=2, pad=1):
    """(size, out_size) 0/1 matrix: column o sums inputs 2o-1..2o+1 (clipped)."""
    m = np.zeros((size, out_size), np.float32)
    for o in range(out_size):
        for k in range(ksize):
            i = o * stride - pad + k
            if 0 <= i < size:
                m[i, o] = 1.0
    return m


def _pick_batch_block(n):
    """Images per grid step: amortise step overhead but keep >=2 steps if we can."""
    if n <= 2:
        return 1
    for nb in (8, 4, 2, 1):
        if n % nb == 0 and n // nb >= 2:
            return nb
    return 1


# --------------------------------------------------------------------------
# Pallas kernel
# --------------------------------------------------------------------------
def _make_ail_kernel(Nb, H, W, Ho, Wo, Cin, Cout):
    S = H * W
    M = Nb * S           # flat (lane) extent of one grid step
    C2 = 2 * Cout

    def kernel(x_ref, hpos_ref, wpos_ref, w1_ref, dw_ref, dwb_ref,
               pw_ref, pwb_ref, poolw_ref, out_ref):
        xf = x_ref[...]                    # (Cin, M)  channels-first, lane-dense
        hpos = hpos_ref[...]               # (1, M) int32: row index inside image
        wpos = wpos_ref[...]               # (1, M) int32: col index inside image

        def shifted_masked(src, dy, dx):
            """src viewed as (rows, Nb, H, W): value at (h+dy, w+dx), 0 outside."""
            off = dy * W + dx
            v = src if off == 0 else pltpu.roll(src, shift=(-off) % M, axis=1)
            conds = []
            if dy > 0:
                conds.append(hpos < (H - dy))
            elif dy < 0:
                conds.append(hpos >= (-dy))
            if dx > 0:
                conds.append(wpos < (W - dx))
            elif dx < 0:
                conds.append(wpos >= (-dx))
            if conds:
                m = conds[0]
                for extra in conds[1:]:
                    m = m & extra
                v = jnp.where(m, v, 0.0)
            return v

        # ---- channel1: 1x1 conv (no bias) + ReLU --------------------------
        x1 = jnp.dot(w1_ref[...], xf, preferred_element_type=jnp.float32)
        x1 = jnp.maximum(x1, 0.0)                                  # (Cout, M)

        # ---- channel2a: depthwise 3x3, padding=1, groups=Cin --------------
        dwm = dw_ref[...]                                          # (Cin, 9)
        acc = xf * dwm[:, 4:5]                                     # centre tap
        for kh in range(3):
            for kw in range(3):
                if kh == 1 and kw == 1:
                    continue
                k = kh * 3 + kw
                acc = acc + shifted_masked(xf, kh - 1, kw - 1) * dwm[:, k:k + 1]
        acc = acc + dwb_ref[...]                                   # + bias (Cin,1)

        # ---- channel2b: pointwise 1x1 (+bias) + sigmoid --------------------
        wl = jnp.dot(pw_ref[...], acc, preferred_element_type=jnp.float32)
        wl = wl + pwb_ref[...]
        w_sig = pl.reciprocal(1.0 + jnp.exp(-wl))                  # (Cout, M), EUP

        # ---- gate ----------------------------------------------------------
        xc = w_sig * x1
        both = jnp.concatenate([xc, w_sig], axis=0)                # (2*Cout, M)

        # ---- AvgPool2d(3, s=2, p=1) on xc and w_sig; /9 cancels in Xs/Wa ---
        # vertical 3-sum (two masked rolls by +-W on the flat layout)
        vsum = both
        for dy in (-1, 1):
            vsum = vsum + shifted_masked(both, dy, 0)

        # gather the even rows (h = 2*ho) of every image -> (2*Cout, Nb*Ho, W)
        slabs = []
        for b in range(Nb):
            for ho in range(Ho):
                s0 = (b * H + 2 * ho) * W
                slabs.append(vsum[:, s0:s0 + W][:, None, :])
        rows = jnp.concatenate(slabs, axis=1)
        rows2 = rows.reshape(C2 * Nb * Ho, W)

        # horizontal 3-sum + stride-2 column selection as one tiny matmul
        pooled = jnp.dot(rows2, poolw_ref[...],
                         preferred_element_type=jnp.float32)       # (C2*Nb*Ho, Wo)
        x_pool = pooled[:Cout * Nb * Ho]
        w_pool = pooled[Cout * Nb * Ho:]
        res = x_pool * pl.reciprocal(w_pool)                       # (Cout*Nb*Ho, Wo)

        # store: out block is (Cout, Nb*Ho, Wo)
        for c in range(Cout):
            out_ref[c] = res[c * Nb * Ho:(c + 1) * Nb * Ho, :]

    return kernel


# --------------------------------------------------------------------------
# wrapper
# --------------------------------------------------------------------------
def ail_forward(x_nchw, params):
    """AIL forward.  x_nchw: (N, Cin, H, W) f32.  Returns (N, Cout, Ho, Wo)."""
    w1, dw, dwb, pw, pwb = params   # (Cout,Cin), (Cin,3,3), (Cin,), (Cout,Cin), (Cout,)
    x = x_nchw.astype(jnp.float32)
    N, Cin, H, W = x.shape
    Cout = w1.shape[0]
    assert H % 2 == 0 and W % 2 == 0, "even spatial sizes required"
    # TODO(synk): odd H/W (stride-2 pooling tail) would need a padded last row/col.
    Ho, Wo = _out_size(H), _out_size(W)

    Nb = _pick_batch_block(N)
    grid = (N // Nb,)
    M = Nb * H * W

    # channels-first, flattened-spatial operand (lane-dense inside the kernel)
    xcf = jnp.transpose(x, (1, 0, 2, 3)).reshape(Cin, N * H * W)

    hpos = jnp.asarray(np.tile(np.repeat(np.arange(H, dtype=np.int32), W), Nb)[None, :])
    wpos = jnp.asarray(np.tile(np.arange(W, dtype=np.int32), Nb * H)[None, :])
    poolw = jnp.asarray(_pool_matrix(W, Wo))                      # (W, Wo) 0/1 sums

    w1m = w1.astype(jnp.float32)                                  # (Cout, Cin)
    dwm = dw.reshape(Cin, 9).astype(jnp.float32)                  # (Cin, 9)
    dwb2 = dwb.reshape(Cin, 1).astype(jnp.float32)
    pwm = pw.astype(jnp.float32)                                  # (Cout, Cin)
    pwb2 = pwb.reshape(Cout, 1).astype(jnp.float32)

    kernel = _make_ail_kernel(Nb, H, W, Ho, Wo, Cin, Cout)

    out = pl.pallas_call(
        kernel,
        out_shape=jax.ShapeDtypeStruct((Cout, N * Ho, Wo), jnp.float32),
        grid_spec=pltpu.PrefetchScalarGridSpec(
            num_scalar_prefetch=0,
            grid=grid,
            in_specs=[
                pl.BlockSpec((Cin, M), lambda b: (0, b)),          # x (per batch block)
                pl.BlockSpec((1, M), lambda b: (0, 0)),            # hpos (grid-invariant)
                pl.BlockSpec((1, M), lambda b: (0, 0)),            # wpos
                pl.BlockSpec((Cout, Cin), lambda b: (0, 0)),       # w1
                pl.BlockSpec((Cin, 9), lambda b: (0, 0)),          # depthwise taps
                pl.BlockSpec((Cin, 1), lambda b: (0, 0)),          # depthwise bias
                pl.BlockSpec((Cout, Cin), lambda b: (0, 0)),       # pointwise
                pl.BlockSpec((Cout, 1), lambda b: (0, 0)),         # pointwise bias
                pl.BlockSpec((W, Wo), lambda b: (0, 0)),           # pool-W 0/1 matrix
            ],
            out_specs=pl.BlockSpec((Cout, Nb * Ho, Wo), lambda b: (0, b, 0)),
        ),
        compiler_params=pltpu.CompilerParams(
            dimension_semantics=("parallel",),
            vmem_limit_bytes=32 * 1024 * 1024),
    )(xcf, hpos, wpos, w1m, dwm, dwb2, pwm, pwb2, poolw)

    out = out.reshape(Cout, N, Ho, Wo)
    return jnp.transpose(out, (1, 0, 2, 3))                       # -> NCHW


# --------------------------------------------------------------------------
# independent pure-JAX reference (lax conv / reduce_window)
# --------------------------------------------------------------------------
def ail_reference(x_nchw, params):
    w1, dw, dwb, pw, pwb = params
    x = jnp.transpose(x_nchw, (0, 2, 3, 1)).astype(jnp.float32)   # NHWC
    Cin = x.shape[-1]
    Cout = w1.shape[0]
    dn = ('NHWC', 'HWIO', 'NHWC')

    k1 = jnp.transpose(w1, (1, 0)).reshape(1, 1, Cin, Cout)
    X = lax.conv_general_dilated(x, k1, (1, 1), 'VALID', dimension_numbers=dn,
                                 precision=lax.Precision.HIGHEST)
    X = jnp.maximum(X, 0.0)

    kd = jnp.transpose(dw, (1, 2, 0)).reshape(3, 3, 1, Cin)
    Wd = lax.conv_general_dilated(x, kd, (1, 1), ((1, 1), (1, 1)),
                                  dimension_numbers=dn, feature_group_count=Cin,
                                  precision=lax.Precision.HIGHEST) + dwb
    kp = jnp.transpose(pw, (1, 0)).reshape(1, 1, Cin, Cout)
    Wp = lax.conv_general_dilated(Wd, kp, (1, 1), 'VALID', dimension_numbers=dn,
                                  precision=lax.Precision.HIGHEST) + pwb
    Ws = jax.nn.sigmoid(Wp)
    Xc = Ws * X

    def avgpool(a):
        s = lax.reduce_window(a, 0.0, lax.add, (1, 3, 3, 1), (1, 2, 2, 1),
                              ((0, 0), (1, 1), (1, 1), (0, 0)))
        return s / 9.0

    out = avgpool(Xc) / avgpool(Ws)
    return jnp.transpose(out, (0, 3, 1, 2))


# --------------------------------------------------------------------------
if __name__ == "__main__":
    key = jax.random.PRNGKey(0)
    ks = jax.random.split(key, 6)
    N, Cin, Cout, H, W = 2, 4, 8, 16, 16

    x = jax.random.normal(ks[0], (N, Cin, H, W), jnp.float32)
    # synthetic parameters (shapes per nn.Conv2d weights in the PyTorch module)
    w1 = 0.2 * jax.random.normal(ks[1], (Cout, Cin), jnp.float32)   # channel1 (no bias)
    dw = 0.2 * jax.random.normal(ks[2], (Cin, 3, 3), jnp.float32)   # depthwise 3x3
    dwb = 0.1 * jax.random.normal(ks[3], (Cin,), jnp.float32)       # depthwise bias
    pw = 0.2 * jax.random.normal(ks[4], (Cout, Cin), jnp.float32)   # pointwise 1x1
    pwb = 0.1 * jax.random.normal(ks[5], (Cout,), jnp.float32)      # pointwise bias
    params = (w1, dw, dwb, pw, pwb)

    out = jax.block_until_ready(ail_forward(x, params))
    ref = jax.block_until_ready(ail_reference(x, params))
    # default-precision MXU matmuls in the kernel vs HIGHEST-precision reference
    np.testing.assert_allclose(np.asarray(out), np.asarray(ref),
                               rtol=2e-2, atol=2e-3)
    print("KERNEL_OK")
</pallas_src>

<mosaic_0001>
module attributes {stable_mosaic.version = 11 : i64} {
  func.func @kernel(%arg0: i32, %arg1: memref<4x256xf32, #tpu.memory_space<vmem>>, %arg2: memref<1x256xi32, #tpu.memory_space<vmem>>, %arg3: memref<1x256xi32, #tpu.memory_space<vmem>>, %arg4: memref<8x4xf32, #tpu.memory_space<vmem>>, %arg5: memref<4x9xf32, #tpu.memory_space<vmem>>, %arg6: memref<4x1xf32, #tpu.memory_space<vmem>>, %arg7: memref<8x4xf32, #tpu.memory_space<vmem>>, %arg8: memref<8x1xf32, #tpu.memory_space<vmem>>, %arg9: memref<16x8xf32, #tpu.memory_space<vmem>>, %arg10: memref<8x8x8xf32, #tpu.memory_space<vmem>>) attributes {dimension_semantics = [#tpu.dimension_semantics<parallel>], iteration_bounds = array<i64: 2>, scalar_prefetch = 0 : i64, scratch_operands = 0 : i64, tpu.core_type = #tpu.core_type<tc>, window_params = [{transform_indices = @transform_0, window_bounds = array<i64: 4, 256>}, {pipeline_mode = #tpu.pipeline_mode<synchronous>, transform_indices = @transform_1, window_bounds = array<i64: 1, 256>}, {pipeline_mode = #tpu.pipeline_mode<synchronous>, transform_indices = @transform_2, window_bounds = array<i64: 1, 256>}, {pipeline_mode = #tpu.pipeline_mode<synchronous>, transform_indices = @transform_3, window_bounds = array<i64: 8, 4>}, {pipeline_mode = #tpu.pipeline_mode<synchronous>, transform_indices = @transform_4, window_bounds = array<i64: 4, 9>}, {pipeline_mode = #tpu.pipeline_mode<synchronous>, transform_indices = @transform_5, window_bounds = array<i64: 4, 1>}, {pipeline_mode = #tpu.pipeline_mode<synchronous>, transform_indices = @transform_6, window_bounds = array<i64: 8, 4>}, {pipeline_mode = #tpu.pipeline_mode<synchronous>, transform_indices = @transform_7, window_bounds = array<i64: 8, 1>}, {pipeline_mode = #tpu.pipeline_mode<synchronous>, transform_indices = @transform_8, window_bounds = array<i64: 16, 8>}, {transform_indices = @transform_9, window_bounds = array<i64: 8, 8, 8>}]} {
    %c0 = arith.constant 0 : index
    %c0_0 = arith.constant 0 : index
    %0 = vector.load %arg1[%c0, %c0_0] : memref<4x256xf32, #tpu.memory_space<vmem>>, vector<4x256xf32>
    %c0_1 = arith.constant 0 : index
    %c0_2 = arith.constant 0 : index
    %1 = vector.load %arg2[%c0_1, %c0_2] : memref<1x256xi32, #tpu.memory_space<vmem>>, vector<1x256xi32>
    %c0_3 = arith.constant 0 : index
    %c0_4 = arith.constant 0 : index
    %2 = vector.load %arg3[%c0_3, %c0_4] : memref<1x256xi32, #tpu.memory_space<vmem>>, vector<1x256xi32>
    %c0_5 = arith.constant 0 : index
    %c0_6 = arith.constant 0 : index
    %3 = vector.load %arg4[%c0_5, %c0_6] : memref<8x4xf32, #tpu.memory_space<vmem>>, vector<8x4xf32>
    %cst = arith.constant dense<0.000000e+00> : vector<8x256xf32>
    %4 = tpu.matmul %3, %0, %cst {dimension_numbers = #tpu.dot_dimension_numbers<[1], [0], [0], [1], [0, 0, 1, 1], [], []>} : vector<8x4xf32>, vector<4x256xf32>, vector<8x256xf32> -> vector<8x256xf32>
    %cst_7 = arith.constant 0.000000e+00 : f32
    %5 = vector.broadcast %cst_7 : f32 to vector<8x256xf32>
    %6 = arith.maximumf %4, %5 : vector<8x256xf32>
    %c0_8 = arith.constant 0 : index
    %c0_9 = arith.constant 0 : index
    %7 = vector.load %arg5[%c0_8, %c0_9] : memref<4x9xf32, #tpu.memory_space<vmem>>, vector<4x9xf32>
    %8 = vector.extract_strided_slice %7 {offsets = [0, 4], sizes = [4, 1], strides = [1, 1]} : vector<4x9xf32> to vector<4x1xf32>
    %9 = vector.broadcast %8 : vector<4x1xf32> to vector<4x256xf32>
    %10 = arith.mulf %0, %9 : vector<4x256xf32>
    %c17_i32 = arith.constant 17 : i32
    %11 = tpu.dynamic_rotate %0 by %c17_i32 dim 1 : vector<4x256xf32>, i32 -> vector<4x256xf32>
    %c1_i32 = arith.constant 1 : i32
    %12 = vector.broadcast %c1_i32 : i32 to vector<1x256xi32>
    %13 = arith.cmpi sge, %1, %12 : vector<1x256xi32>
    %c1_i32_10 = arith.constant 1 : i32
    %14 = vector.broadcast %c1_i32_10 : i32 to vector<1x256xi32>
    %15 = arith.cmpi sge, %2, %14 : vector<1x256xi32>
    %16 = arith.andi %13, %15 : vector<1x256xi1>
    %cst_11 = arith.constant 0.000000e+00 : f32
    %17 = vector.shape_cast %16 : vector<1x256xi1> to vector<1x256xi1>
    %18 = vector.broadcast %17 : vector<1x256xi1> to vector<4x256xi1>
    %19 = vector.broadcast %cst_11 : f32 to vector<4x256xf32>
    %20 = arith.select %18, %11, %19 : vector<4x256xi1>, vector<4x256xf32>
    %21 = vector.extract_strided_slice %7 {offsets = [0, 0], sizes = [4, 1], strides = [1, 1]} : vector<4x9xf32> to vector<4x1xf32>
    %22 = vector.broadcast %21 : vector<4x1xf32> to vector<4x256xf32>
    %23 = arith.mulf %20, %22 : vector<4x256xf32>
    %24 = arith.addf %10, %23 : vector<4x256xf32>
    %c16_i32 = arith.constant 16 : i32
    %25 = tpu.dynamic_rotate %0 by %c16_i32 dim 1 : vector<4x256xf32>, i32 -> vector<4x256xf32>
    %c1_i32_12 = arith.constant 1 : i32
    %26 = vector.broadcast %c1_i32_12 : i32 to vector<1x256xi32>
    %27 = arith.cmpi sge, %1, %26 : vector<1x256xi32>
    %cst_13 = arith.constant 0.000000e+00 : f32
    %28 = vector.shape_cast %27 : vector<1x256xi1> to vector<1x256xi1>
    %29 = vector.broadcast %28 : vector<1x256xi1> to vector<4x256xi1>
    %30 = vector.broadcast %cst_13 : f32 to vector<4x256xf32>
    %31 = arith.select %29, %25, %30 : vector<4x256xi1>, vector<4x256xf32>
    %32 = vector.extract_strided_slice %7 {offsets = [0, 1], sizes = [4, 1], strides = [1, 1]} : vector<4x9xf32> to vector<4x1xf32>
    %33 = vector.broadcast %32 : vector<4x1xf32> to vector<4x256xf32>
    %34 = arith.mulf %31, %33 : vector<4x256xf32>
    %35 = arith.addf %24, %34 : vector<4x256xf32>
    %c15_i32 = arith.constant 15 : i32
    %36 = tpu.dynamic_rotate %0 by %c15_i32 dim 1 : vector<4x256xf32>, i32 -> vector<4x256xf32>
    %c1_i32_14 = arith.constant 1 : i32
    %37 = vector.broadcast %c1_i32_14 : i32 to vector<1x256xi32>
    %38 = arith.cmpi sge, %1, %37 : vector<1x256xi32>
    %c15_i32_15 = arith.constant 15 : i32
    %39 = vector.broadcast %c15_i32_15 : i32 to vector<1x256xi32>
    %40 = arith.cmpi slt, %2, %39 : vector<1x256xi32>
    %41 = arith.andi %38, %40 : vector<1x256xi1>
    %cst_16 = arith.constant 0.000000e+00 : f32
    %42 = vector.shape_cast %41 : vector<1x256xi1> to vector<1x256xi1>
    %43 = vector.broadcast %42 : vector<1x256xi1> to vector<4x256xi1>
    %44 = vector.broadcast %cst_16 : f32 to vector<4x256xf32>
    %45 = arith.select %43, %36, %44 : vector<4x256xi1>, vector<4x256xf32>
    %46 = vector.extract_strided_slice %7 {offsets = [0, 2], sizes = [4, 1], strides = [1, 1]} : vector<4x9xf32> to vector<4x1xf32>
    %47 = vector.broadcast %46 : vector<4x1xf32> to vector<4x256xf32>
    %48 = arith.mulf %45, %47 : vector<4x256xf32>
    %49 = arith.addf %35, %48 : vector<4x256xf32>
    %c1_i32_17 = arith.constant 1 : i32
    %50 = tpu.dynamic_rotate %0 by %c1_i32_17 dim 1 : vector<4x256xf32>, i32 -> vector<4x256xf32>
    %c1_i32_18 = arith.constant 1 : i32
    %51 = vector.broadcast %c1_i32_18 : i32 to vector<1x256xi32>
    %52 = arith.cmpi sge, %2, %51 : vector<1x256xi32>
    %cst_19 = arith.constant 0.000000e+00 : f32
    %53 = vector.shape_cast %52 : vector<1x256xi1> to vector<1x256xi1>
    %54 = vector.broadcast %53 : vector<1x256xi1> to vector<4x256xi1>
    %55 = vector.broadcast %cst_19 : f32 to vector<4x256xf32>
    %56 = arith.select %54, %50, %55 : vector<4x256xi1>, vector<4x256xf32>
    %57 = vector.extract_strided_slice %7 {offsets = [0, 3], sizes = [4, 1], strides = [1, 1]} : vector<4x9xf32> to vector<4x1xf32>
    %58 = vector.broadcast %57 : vector<4x1xf32> to vector<4x256xf32>
    %59 = arith.mulf %56, %58 : vector<4x256xf32>
    %60 = arith.addf %49, %59 : vector<4x256xf32>
    %c255_i32 = arith.constant 255 : i32
    %61 = tpu.dynamic_rotate %0 by %c255_i32 dim 1 : vector<4x256xf32>, i32 -> vector<4x256xf32>
    %c15_i32_20 = arith.constant 15 : i32
    %62 = vector.broadcast %c15_i32_20 : i32 to vector<1x256xi32>
    %63 = arith.cmpi slt, %2, %62 : vector<1x256xi32>
    %cst_21 = arith.constant 0.000000e+00 : f32
    %64 = vector.shape_cast %63 : vector<1x256xi1> to vector<1x256xi1>
    %65 = vector.broadcast %64 : vector<1x256xi1> to vector<4x256xi1>
    %66 = vector.broadcast %cst_21 : f32 to vector<4x256xf32>
    %67 = arith.select %65, %61, %66 : vector<4x256xi1>, vector<4x256xf32>
    %68 = vector.extract_strided_slice %7 {offsets = [0, 5], sizes = [4, 1], strides = [1, 1]} : vector<4x9xf32> to vector<4x1xf32>
    %69 = vector.broadcast %68 : vector<4x1xf32> to vector<4x256xf32>
    %70 = arith.mulf %67, %69 : vector<4x256xf32>
    %71 = arith.addf %60, %70 : vector<4x256xf32>
    %c241_i32 = arith.constant 241 : i32
    %72 = tpu.dynamic_rotate %0 by %c241_i32 dim 1 : vector<4x256xf32>, i32 -> vector<4x256xf32>
    %c15_i32_22 = arith.constant 15 : i32
    %73 = vector.broadcast %c15_i32_22 : i32 to vector<1x256xi32>
    %74 = arith.cmpi slt, %1, %73 : vector<1x256xi32>
    %c1_i32_23 = arith.constant 1 : i32
    %75 = vector.broadcast %c1_i32_23 : i32 to vector<1x256xi32>
    %76 = arith.cmpi sge, %2, %75 : vector<1x256xi32>
    %77 = arith.andi %74, %76 : vector<1x256xi1>
    %cst_24 = arith.constant 0.000000e+00 : f32
    %78 = vector.shape_cast %77 : vector<1x256xi1> to vector<1x256xi1>
    %79 = vector.broadcast %78 : vector<1x256xi1> to vector<4x256xi1>
    %80 = vector.broadcast %cst_24 : f32 to vector<4x256xf32>
    %81 = arith.select %79, %72, %80 : vector<4x256xi1>, vector<4x256xf32>
    %82 = vector.extract_strided_slice %7 {offsets = [0, 6], sizes = [4, 1], strides = [1, 1]} : vector<4x9xf32> to vector<4x1xf32>
    %83 = vector.broadcast %82 : vector<4x1xf32> to vector<4x256xf32>
    %84 = arith.mulf %81, %83 : vector<4x256xf32>
    %85 = arith.addf %71, %84 : vector<4x256xf32>
    %c240_i32 = arith.constant 240 : i32
    %86 = tpu.dynamic_rotate %0 by %c240_i32 dim 1 : vector<4x256xf32>, i32 -> vector<4x256xf32>
    %c15_i32_25 = arith.constant 15 : i32
    %87 = vector.broadcast %c15_i32_25 : i32 to vector<1x256xi32>
    %88 = arith.cmpi slt, %1, %87 : vector<1x256xi32>
    %cst_26 = arith.constant 0.000000e+00 : f32
    %89 = vector.shape_cast %88 : vector<1x256xi1> to vector<1x256xi1>
    %90 = vector.broadcast %89 : vector<1x256xi1> to vector<4x256xi1>
    %91 = vector.broadcast %cst_26 : f32 to vector<4x256xf32>
    %92 = arith.select %90, %86, %91 : vector<4x256xi1>, vector<4x256xf32>
    %93 = vector.extract_strided_slice %7 {offsets = [0, 7], sizes = [4, 1], strides = [1, 1]} : vector<4x9xf32> to vector<4x1xf32>
    %94 = vector.broadcast %93 : vector<4x1xf32> to vector<4x256xf32>
    %95 = arith.mulf %92, %94 : vector<4x256xf32>
    %96 = arith.addf %85, %95 : vector<4x256xf32>
    %c239_i32 = arith.constant 239 : i32
    %97 = tpu.dynamic_rotate %0 by %c239_i32 dim 1 : vector<4x256xf32>, i32 -> vector<4x256xf32>
    %c15_i32_27 = arith.constant 15 : i32
    %98 = vector.broadcast %c15_i32_27 : i32 to vector<1x256xi32>
    %99 = arith.cmpi slt, %1, %98 : vector<1x256xi32>
    %c15_i32_28 = arith.constant 15 : i32
    %100 = vector.broadcast %c15_i32_28 : i32 to vector<1x256xi32>
    %101 = arith.cmpi slt, %2, %100 : vector<1x256xi32>
    %102 = arith.andi %99, %101 : vector<1x256xi1>
    %cst_29 = arith.constant 0.000000e+00 : f32
    %103 = vector.shape_cast %102 : vector<1x256xi1> to vector<1x256xi1>
    %104 = vector.broadcast %103 : vector<1x256xi1> to vector<4x256xi1>
    %105 = vector.broadcast %cst_29 : f32 to vector<4x256xf32>
    %106 = arith.select %104, %97, %105 : vector<4x256xi1>, vector<4x256xf32>
    %107 = vector.extract_strided_slice %7 {offsets = [0, 8], sizes = [4, 1], strides = [1, 1]} : vector<4x9xf32> to vector<4x1xf32>
    %108 = vector.broadcast %107 : vector<4x1xf32> to vector<4x256xf32>
    %109 = arith.mulf %106, %108 : vector<4x256xf32>
    %110 = arith.addf %96, %109 : vector<4x256xf32>
    %c0_30 = arith.constant 0 : index
    %c0_31 = arith.constant 0 : index
    %111 = vector.load %arg6[%c0_30, %c0_31] : memref<4x1xf32, #tpu.memory_space<vmem>>, vector<4x1xf32>
    %112 = vector.broadcast %111 : vector<4x1xf32> to vector<4x256xf32>
    %113 = arith.addf %110, %112 : vector<4x256xf32>
    %c0_32 = arith.constant 0 : index
    %c0_33 = arith.constant 0 : index
    %114 = vector.load %arg7[%c0_32, %c0_33] : memref<8x4xf32, #tpu.memory_space<vmem>>, vector<8x4xf32>
    %cst_34 = arith.constant dense<0.000000e+00> : vector<8x256xf32>
    %115 = tpu.matmul %114, %113, %cst_34 {dimension_numbers = #tpu.dot_dimension_numbers<[1], [0], [0], [1], [0, 0, 1, 1], [], []>} : vector<8x4xf32>, vector<4x256xf32>, vector<8x256xf32> -> vector<8x256xf32>
    %c0_35 = arith.constant 0 : index
    %c0_36 = arith.constant 0 : index
    %116 = vector.load %arg8[%c0_35, %c0_36] : memref<8x1xf32, #tpu.memory_space<vmem>>, vector<8x1xf32>
    %117 = vector.broadcast %116 : vector<8x1xf32> to vector<8x256xf32>
    %118 = arith.addf %115, %117 : vector<8x256xf32>
    %cst_37 = arith.constant 0.000000e+00 : f32
    %119 = vector.broadcast %cst_37 : f32 to vector<8x256xf32>
    %120 = arith.subf %119, %118 : vector<8x256xf32>
    %121 = math.exp %120 : vector<8x256xf32>
    %cst_38 = arith.constant 1.000000e+00 : f32
    %122 = vector.broadcast %cst_38 : f32 to vector<8x256xf32>
    %123 = arith.addf %122, %121 : vector<8x256xf32>
    %124 = tpu.reciprocal %123 : vector<8x256xf32> -> vector<8x256xf32>
    %125 = arith.mulf %124, %6 : vector<8x256xf32>
    %126 = tpu.concatenate %125, %124 in 0 : vector<8x256xf32>, vector<8x256xf32> -> vector<16x256xf32>
    %c16_i32_39 = arith.constant 16 : i32
    %127 = tpu.dynamic_rotate %126 by %c16_i32_39 dim 1 : vector<16x256xf32>, i32 -> vector<16x256xf32>
    %c1_i32_40 = arith.constant 1 : i32
    %128 = vector.broadcast %c1_i32_40 : i32 to vector<1x256xi32>
    %129 = arith.cmpi sge, %1, %128 : vector<1x256xi32>
    %cst_41 = arith.constant 0.000000e+00 : f32
    %130 = vector.shape_cast %129 : vector<1x256xi1> to vector<1x256xi1>
    %131 = vector.broadcast %130 : vector<1x256xi1> to vector<16x256xi1>
    %132 = vector.broadcast %cst_41 : f32 to vector<16x256xf32>
    %133 = arith.select %131, %127, %132 : vector<16x256xi1>, vector<16x256xf32>
    %134 = arith.addf %126, %133 : vector<16x256xf32>
    %c240_i32_42 = arith.constant 240 : i32
    %135 = tpu.dynamic_rotate %126 by %c240_i32_42 dim 1 : vector<16x256xf32>, i32 -> vector<16x256xf32>
    %c15_i32_43 = arith.constant 15 : i32
    %136 = vector.broadcast %c15_i32_43 : i32 to vector<1x256xi32>
    %137 = arith.cmpi slt, %1, %136 : vector<1x256xi32>
    %cst_44 = arith.constant 0.000000e+00 : f32
    %138 = vector.shape_cast %137 : vector<1x256xi1> to vector<1x256xi1>
    %139 = vector.broadcast %138 : vector<1x256xi1> to vector<16x256xi1>
    %140 = vector.broadcast %cst_44 : f32 to vector<16x256xf32>
    %141 = arith.select %139, %135, %140 : vector<16x256xi1>, vector<16x256xf32>
    %142 = arith.addf %134, %141 : vector<16x256xf32>
    %143 = vector.extract_strided_slice %142 {offsets = [0, 0], sizes = [16, 16], strides = [1, 1]} : vector<16x256xf32> to vector<16x16xf32>
    %144 = vector.shape_cast %143 : vector<16x16xf32> to vector<16x1x16xf32>
    %145 = vector.extract_strided_slice %142 {offsets = [0, 32], sizes = [16, 16], strides = [1, 1]} : vector<16x256xf32> to vector<16x16xf32>
    %146 = vector.shape_cast %145 : vector<16x16xf32> to vector<16x1x16xf32>
    %147 = vector.extract_strided_slice %142 {offsets = [0, 64], sizes = [16, 16], strides = [1, 1]} : vector<16x256xf32> to vector<16x16xf32>
    %148 = vector.shape_cast %147 : vector<16x16xf32> to vector<16x1x16xf32>
    %149 = vector.extract_strided_slice %142 {offsets = [0, 96], sizes = [16, 16], strides = [1, 1]} : vector<16x256xf32> to vector<16x16xf32>
    %150 = vector.shape_cast %149 : vector<16x16xf32> to vector<16x1x16xf32>
    %151 = vector.extract_strided_slice %142 {offsets = [0, 128], sizes = [16, 16], strides = [1, 1]} : vector<16x256xf32> to vector<16x16xf32>
    %152 = vector.shape_cast %151 : vector<16x16xf32> to vector<16x1x16xf32>
    %153 = vector.extract_strided_slice %142 {offsets = [0, 160], sizes = [16, 16], strides = [1, 1]} : vector<16x256xf32> to vector<16x16xf32>
    %154 = vector.shape_cast %153 : vector<16x16xf32> to vector<16x1x16xf32>
    %155 = vector.extract_strided_slice %142 {offsets = [0, 192], sizes = [16, 16], strides = [1, 1]} : vector<16x256xf32> to vector<16x16xf32>
    %156 = vector.shape_cast %155 : vector<16x16xf32> to vector<16x1x16xf32>
    %157 = vector.extract_strided_slice %142 {offsets = [0, 224], sizes = [16, 16], strides = [1, 1]} : vector<16x256xf32> to vector<16x16xf32>
    %158 = vector.shape_cast %157 : vector<16x16xf32> to vector<16x1x16xf32>
    %159 = tpu.concatenate %144, %146, %148, %150, %152, %154, %156, %158 in 1 : vector<16x1x16xf32>, vector<16x1x16xf32>, vector<16x1x16xf32>, vector<16x1x16xf32>, vector<16x1x16xf32>, vector<16x1x16xf32>, vector<16x1x16xf32>, vector<16x1x16xf32> -> vector<16x8x16xf32>
    %160 = vector.shape_cast %159 : vector<16x8x16xf32> to vector<128x16xf32>
    %c0_45 = arith.constant 0 : index
    %c0_46 = arith.constant 0 : index
    %161 = vector.load %arg9[%c0_45, %c0_46] : memref<16x8xf32, #tpu.memory_space<vmem>>, vector<16x8xf32>
    %cst_47 = arith.constant dense<0.000000e+00> : vector<128x8xf32>
    %162 = tpu.matmul %160, %161, %cst_47 {dimension_numbers = #tpu.dot_dimension_numbers<[1], [0], [0], [1], [0, 0, 1, 1], [], []>} : vector<128x16xf32>, vector<16x8xf32>, vector<128x8xf32> -> vector<128x8xf32>
    %163 = vector.extract_strided_slice %162 {offsets = [0, 0], sizes = [64, 8], strides = [1, 1]} : vector<128x8xf32> to vector<64x8xf32>
    %164 = vector.extract_strided_slice %162 {offsets = [64, 0], sizes = [64, 8], strides = [1, 1]} : vector<128x8xf32> to vector<64x8xf32>
    %165 = tpu.reciprocal %164 : vector<64x8xf32> -> vector<64x8xf32>
    %166 = arith.mulf %163, %165 : vector<64x8xf32>
    %167 = vector.extract_strided_slice %166 {offsets = [0, 0], sizes = [8, 8], strides = [1, 1]} : vector<64x8xf32> to vector<8x8xf32>
    %c0_48 = arith.constant 0 : index
    %c0_49 = arith.constant 0 : index
    %c0_50 = arith.constant 0 : index
    %168 = vector.load %arg10[%c0_48, %c0_49, %c0_50] : memref<8x8x8xf32, #tpu.memory_space<vmem>>, vector<1x8x8xf32>
    %169 = vector.shape_cast %168 : vector<1x8x8xf32> to vector<8x8xf32>
    %170 = vector.shape_cast %167 : vector<8x8xf32> to vector<1x8x8xf32>
    tpu.vector_store %arg10[%c0_48, %c0_49, %c0_50], %170 {strides = array<i32>} : memref<8x8x8xf32, #tpu.memory_space<vmem>>, vector<1x8x8xf32>,
    %171 = vector.extract_strided_slice %166 {offsets = [8, 0], sizes = [8, 8], strides = [1, 1]} : vector<64x8xf32> to vector<8x8xf32>
    %c1 = arith.constant 1 : index
    %c0_51 = arith.constant 0 : index
    %c0_52 = arith.constant 0 : index
    %172 = vector.load %arg10[%c1, %c0_51, %c0_52] : memref<8x8x8xf32, #tpu.memory_space<vmem>>, vector<1x8x8xf32>
    %173 = vector.shape_cast %172 : vector<1x8x8xf32> to vector<8x8xf32>
    %174 = vector.shape_cast %171 : vector<8x8xf32> to vector<1x8x8xf32>
    tpu.vector_store %arg10[%c1, %c0_51, %c0_52], %174 {strides = array<i32>} : memref<8x8x8xf32, #tpu.memory_space<vmem>>, vector<1x8x8xf32>,
    %175 = vector.extract_strided_slice %166 {offsets = [16, 0], sizes = [8, 8], strides = [1, 1]} : vector<64x8xf32> to vector<8x8xf32>
    %c2 = arith.constant 2 : index
    %c0_53 = arith.constant 0 : index
    %c0_54 = arith.constant 0 : index
    %176 = vector.load %arg10[%c2, %c0_53, %c0_54] : memref<8x8x8xf32, #tpu.memory_space<vmem>>, vector<1x8x8xf32>
    %177 = vector.shape_cast %176 : vector<1x8x8xf32> to vector<8x8xf32>
    %178 = vector.shape_cast %175 : vector<8x8xf32> to vector<1x8x8xf32>
    tpu.vector_store %arg10[%c2, %c0_53, %c0_54], %178 {strides = array<i32>} : memref<8x8x8xf32, #tpu.memory_space<vmem>>, vector<1x8x8xf32>,
    %179 = vector.extract_strided_slice %166 {offsets = [24, 0], sizes = [8, 8], strides = [1, 1]} : vector<64x8xf32> to vector<8x8xf32>
    %c3 = arith.constant 3 : index
    %c0_55 = arith.constant 0 : index
    %c0_56 = arith.constant 0 : index
    %180 = vector.load %arg10[%c3, %c0_55, %c0_56] : memref<8x8x8xf32, #tpu.memory_space<vmem>>, vector<1x8x8xf32>
    %181 = vector.shape_cast %180 : vector<1x8x8xf32> to vector<8x8xf32>
    %182 = vector.shape_cast %179 : vector<8x8xf32> to vector<1x8x8xf32>
    tpu.vector_store %arg10[%c3, %c0_55, %c0_56], %182 {strides = array<i32>} : memref<8x8x8xf32, #tpu.memory_space<vmem>>, vector<1x8x8xf32>,
    %183 = vector.extract_strided_slice %166 {offsets = [32, 0], sizes = [8, 8], strides = [1, 1]} : vector<64x8xf32> to vector<8x8xf32>
    %c4 = arith.constant 4 : index
    %c0_57 = arith.constant 0 : index
    %c0_58 = arith.constant 0 : index
    %184 = vector.load %arg10[%c4, %c0_57, %c0_58] : memref<8x8x8xf32, #tpu.memory_space<vmem>>, vector<1x8x8xf32>
    %185 = vector.shape_cast %184 : vector<1x8x8xf32> to vector<8x8xf32>
    %186 = vector.shape_cast %183 : vector<8x8xf32> to vector<1x8x8xf32>
    tpu.vector_store %arg10[%c4, %c0_57, %c0_58], %186 {strides = array<i32>} : memref<8x8x8xf32, #tpu.memory_space<vmem>>, vector<1x8x8xf32>,
    %187 = vector.extract_strided_slice %166 {offsets = [40, 0], sizes = [8, 8], strides = [1, 1]} : vector<64x8xf32> to vector<8x8xf32>
    %c5 = arith.constant 5 : index
    %c0_59 = arith.constant 0 : index
    %c0_60 = arith.constant 0 : index
    %188 = vector.load %arg10[%c5, %c0_59, %c0_60] : memref<8x8x8xf32, #tpu.memory_space<vmem>>, vector<1x8x8xf32>
    %189 = vector.shape_cast %188 : vector<1x8x8xf32> to vector<8x8xf32>
    %190 = vector.shape_cast %187 : vector<8x8xf32> to vector<1x8x8xf32>
    tpu.vector_store %arg10[%c5, %c0_59, %c0_60], %190 {strides = array<i32>} : memref<8x8x8xf32, #tpu.memory_space<vmem>>, vector<1x8x8xf32>,
    %191 = vector.extract_strided_slice %166 {offsets = [48, 0], sizes = [8, 8], strides = [1, 1]} : vector<64x8xf32> to vector<8x8xf32>
    %c6 = arith.constant 6 : index
    %c0_61 = arith.constant 0 : index
    %c0_62 = arith.constant 0 : index
    %192 = vector.load %arg10[%c6, %c0_61, %c0_62] : memref<8x8x8xf32, #tpu.memory_space<vmem>>, vector<1x8x8xf32>
    %193 = vector.shape_cast %192 : vector<1x8x8xf32> to vector<8x8xf32>
    %194 = vector.shape_cast %191 : vector<8x8xf32> to vector<1x8x8xf32>
    tpu.vector_store %arg10[%c6, %c0_61, %c0_62], %194 {strides = array<i32>} : memref<8x8x8xf32, #tpu.memory_space<vmem>>, vector<1x8x8xf32>,
    %195 = vector.extract_strided_slice %166 {offsets = [56, 0], sizes = [8, 8], strides = [1, 1]} : vector<64x8xf32> to vector<8x8xf32>
    %c7 = arith.constant 7 : index
    %c0_63 = arith.constant 0 : index
    %c0_64 = arith.constant 0 : index
    %196 = vector.load %arg10[%c7, %c0_63, %c0_64] : memref<8x8x8xf32, #tpu.memory_space<vmem>>, vector<1x8x8xf32>
    %197 = vector.shape_cast %196 : vector<1x8x8xf32> to vector<8x8xf32>
    %198 = vector.shape_cast %195 : vector<8x8xf32> to vector<1x8x8xf32>
    tpu.vector_store %arg10[%c7, %c0_63, %c0_64], %198 {strides = array<i32>} : memref<8x8x8xf32, #tpu.memory_space<vmem>>, vector<1x8x8xf32>,
    return
  }
  func.func @transform_0(%arg0: i32) -> (i32, i32) {
    %c0_i32 = arith.constant 0 : i32
    %c0_i32_0 = arith.constant 0 : i32
    return %c0_i32, %arg0 : i32, i32
  }
  func.func @transform_1(%arg0: i32) -> (i32, i32) {
    %c0_i32 = arith.constant 0 : i32
    %c0_i32_0 = arith.constant 0 : i32
    %c0_i32_1 = arith.constant 0 : i32
    return %c0_i32, %c0_i32_0 : i32, i32
  }
  func.func @transform_2(%arg0: i32) -> (i32, i32) {
    %c0_i32 = arith.constant 0 : i32
    %c0_i32_0 = arith.constant 0 : i32
    %c0_i32_1 = arith.constant 0 : i32
    return %c0_i32, %c0_i32_0 : i32, i32
  }
  func.func @transform_3(%arg0: i32) -> (i32, i32) {
    %c0_i32 = arith.constant 0 : i32
    %c0_i32_0 = arith.constant 0 : i32
    %c0_i32_1 = arith.constant 0 : i32
    return %c0_i32, %c0_i32_0 : i32, i32
  }
  func.func @transform_4(%arg0: i32) -> (i32, i32) {
    %c0_i32 = arith.constant 0 : i32
    %c0_i32_0 = arith.constant 0 : i32
    %c0_i32_1 = arith.constant 0 : i32
    return %c0_i32, %c0_i32_0 : i32, i32
  }
  func.func @transform_5(%arg0: i32) -> (i32, i32) {
    %c0_i32 = arith.constant 0 : i32
    %c0_i32_0 = arith.constant 0 : i32
    %c0_i32_1 = arith.constant 0 : i32
    return %c0_i32, %c0_i32_0 : i32, i32
  }
  func.func @transform_6(%arg0: i32) -> (i32, i32) {
    %c0_i32 = arith.constant 0 : i32
    %c0_i32_0 = arith.constant 0 : i32
    %c0_i32_1 = arith.constant 0 : i32
    return %c0_i32, %c0_i32_0 : i32, i32
  }
  func.func @transform_7(%arg0: i32) -> (i32, i32) {
    %c0_i32 = arith.constant 0 : i32
    %c0_i32_0 = arith.constant 0 : i32
    %c0_i32_1 = arith.constant 0 : i32
    return %c0_i32, %c0_i32_0 : i32, i32
  }
  func.func @transform_8(%arg0: i32) -> (i32, i32) {
    %c0_i32 = arith.constant 0 : i32
    %c0_i32_0 = arith.constant 0 : i32
    %c0_i32_1 = arith.constant 0 : i32
    return %c0_i32, %c0_i32_0 : i32, i32
  }
  func.func @transform_9(%arg0: i32) -> (i32, i32, i32) {
    %c0_i32 = arith.constant 0 : i32
    %c0_i32_0 = arith.constant 0 : i32
    %c0_i32_1 = arith.constant 0 : i32
    return %c0_i32, %arg0, %c0_i32_0 : i32, i32, i32
  }
}

</mosaic_0001>

<llo_original>
// kernel: tpu_custom_call.1
$region0: #{tpu_custom_call.1}
  #allocation0 [shape = 'u32[]', space=smem, size = 0x4, offset = 0x4, fixed_abs, tag = 'smem constant byte address 0x4 - core index']
  #allocation1 [shape = 'u32[144,128]{1,0:T(1,128)}', space=vmem, size = 0x12000, scoped, tag = 'internal scratch']
  %s0 = inlined_call_operand.vmem [shape: f32[4,512], index: 0, kind: input, shape index: {}]
  %s1 = inlined_call_operand.vmem [shape: s32[1,256], index: 1, kind: input, shape index: {}]
  %s2 = inlined_call_operand.vmem [shape: s32[1,256], index: 2, kind: input, shape index: {}]
  %s3 = inlined_call_operand.vmem [shape: f32[8,4], index: 3, kind: input, shape index: {}]
  %s4 = inlined_call_operand.vmem [shape: f32[4,9], index: 4, kind: input, shape index: {}]
  %s5 = inlined_call_operand.vmem [shape: f32[4,1], index: 5, kind: input, shape index: {}]
  %s6 = inlined_call_operand.vmem [shape: f32[8,4], index: 6, kind: input, shape index: {}]
  %s7 = inlined_call_operand.vmem [shape: f32[8,1], index: 7, kind: input, shape index: {}]
  %s8 = inlined_call_operand.vmem [shape: f32[16,8], index: 8, kind: input, shape index: {}]
  %s9 = inlined_call_operand.vmem [shape: f32[8,16,8], index: 9, kind: output, shape index: {}]
  %s10 = sld [smem:[#allocation0]]
  $region103: #{tpu_custom_call.1} parent=0
    _
  %s12 = ssub.s32 1, %s10
  %s13 = scalar_select 0, %s12, %s10
  $region1: #{tpu_custom_call.1} parent=0
    #allocation2 [shape = 'u8[65536]{0}', space=vmem, size = 0x10000, scoped, tag = 'output window, operand 0']
    loop: start=0, step=1, limit=4
    $region2: #{tpu_custom_call.1} parent=1 // loop_pre_header
      _
    $region3: #{tpu_custom_call.1} parent=1 // loop_header
      %s15 = sphi 0, %s19
      %p16 = scmp.ge.s32.totalorder %s15, 4
      %s25 = sphi 0, %s27
      %s28 = sphi 0, %s25
      %s29 = sphi 0, %s28
      %s45 = sphi 0, %s29
      %s49 = sphi 0, %s49
      %s51 = sphi 0, %s49
      %s52 = sphi 0, %s51
      %s66 = sphi 0, %s52
      %s70 = sphi 0, %s70
      %s72 = sphi 0, %s70
      %s73 = sphi 0, %s72
      %s87 = sphi 0, %s73
      %s91 = sphi 0, %s91
      %s93 = sphi 0, %s91
      %s94 = sphi 0, %s93
      %s108 = sphi 0, %s94
      %s112 = sphi 0, %s112
      %s114 = sphi 0, %s112
      %s115 = sphi 0, %s114
      %s129 = sphi 0, %s115
      %s133 = sphi 0, %s133
      %s135 = sphi 0, %s133
      %s136 = sphi 0, %s135
      %s150 = sphi 0, %s136
      %s154 = sphi 0, %s154
      %s156 = sphi 0, %s154
      %s157 = sphi 0, %s156
      %s171 = sphi 0, %s157
      %s175 = sphi 0, %s175
      %s177 = sphi 0, %s175
      %s178 = sphi 0, %s177
      %s192 = sphi 0, %s178
      %s196 = sphi 0, %s196
      %s198 = sphi 0, %s196
      %s199 = sphi 0, %s198
      %s213 = sphi 0, %s199
      %s219 = sphi 0, %s221
      %s222 = sphi 0, %s219
      %s223 = sphi 0, %s222
      %s239 = sphi 0, %s223
    $region4: #{tpu_custom_call.1} parent=1 // loop_header_branch
      %18 = sbr.rel (%p16) target = $region8
    $region5: #{tpu_custom_call.1} parent=1 // loop_body
      %s20 = ssub.s32 %s15, 1
      %s21 = ssub.s32 %s15, 2
      %s22 = sadd.s32 %s15, 1
      %s23 = ssub.s32 %s15, %s22
      %p24 = scmp.eq.s32.totalorder %s23, 0
      %s26 = sadd.s32 %s25, 1
      %s27 = scalar_select %p24, %s25, %s26
      %p30 = pneg %p24
      %p31 = scmp.eq.s32.totalorder %s15, 1
      %p32 = por %p30, %p31
      %p33 = scmp.ne.s32.totalorder %s25, %s28
      %p34 = scmp.eq.s32.totalorder %s15, 0
      %p35 = por %p33, %p34
      %p36 = scmp.ne.s32.totalorder %s25, %s28
      %p37 = scmp.eq.s32.totalorder %s20, 1
      %p38 = por %p36, %p37
      %p39 = scmp.ne.s32.totalorder %s28, %s29
      %p40 = scmp.eq.s32.totalorder %s20, 0
      %p41 = por %p39, %p40
      %p42 = scmp.ne.s32.totalorder %s28, %s29
      %p43 = scmp.eq.s32.totalorder %s21, 1
      %p44 = por %p42, %p43
      %p46 = scmp.ne.s32.totalorder %s29, %s45
      %p47 = scmp.eq.s32.totalorder %s21, 0
      %p48 = por %p46, %p47
      %s50 = sadd.s32 %s49, 1
      %p53 = scmp.eq.s32.totalorder %s15, 1
      %p54 = scmp.ne.s32.totalorder %s49, %s51
      %p55 = scmp.eq.s32.totalorder %s15, 0
      %p56 = por %p54, %p55
      %p57 = scmp.ne.s32.totalorder %s49, %s51
      %p58 = scmp.eq.s32.totalorder %s20, 1
      %p59 = por %p57, %p58
      %p60 = scmp.ne.s32.totalorder %s51, %s52
      %p61 = scmp.eq.s32.totalorder %s20, 0
      %p62 = por %p60, %p61
      %p63 = scmp.ne.s32.totalorder %s51, %s52
      %p64 = scmp.eq.s32.totalorder %s21, 1
      %p65 = por %p63, %p64
      %p67 = scmp.ne.s32.totalorder %s52, %s66
      %p68 = scmp.eq.s32.totalorder %s21, 0
      %p69 = por %p67, %p68
      %s71 = sadd.s32 %s70, 1
      %p74 = scmp.eq.s32.totalorder %s15, 1
      %p75 = scmp.ne.s32.totalorder %s70, %s72
      %p76 = scmp.eq.s32.totalorder %s15, 0
      %p77 = por %p75, %p76
      %p78 = scmp.ne.s32.totalorder %s70, %s72
      %p79 = scmp.eq.s32.totalorder %s20, 1
      %p80 = por %p78, %p79
      %p81 = scmp.ne.s32.totalorder %s72, %s73
      %p82 = scmp.eq.s32.totalorder %s20, 0
      %p83 = por %p81, %p82
      %p84 = scmp.ne.s32.totalorder %s72, %s73
      %p85 = scmp.eq.s32.totalorder %s21, 1
      %p86 = por %p84, %p85
      %p88 = scmp.ne.s32.totalorder %s73, %s87
      %p89 = scmp.eq.s32.totalorder %s21, 0
      %p90 = por %p88, %p89
      %s92 = sadd.s32 %s91, 1
      %p95 = scmp.eq.s32.totalorder %s15, 1
      %p96 = scmp.ne.s32.totalorder %s91, %s93
      %p97 = scmp.eq.s32.totalorder %s15, 0
      %p98 = por %p96, %p97
      %p99 = scmp.ne.s32.totalorder %s91, %s93
      %p100 = scmp.eq.s32.totalorder %s20, 1
      %p101 = por %p99, %p100
      %p102 = scmp.ne.s32.totalorder %s93, %s94
      %p103 = scmp.eq.s32.totalorder %s20, 0
      %p104 = por %p102, %p103
      %p105 = scmp.ne.s32.totalorder %s93, %s94
      %p106 = scmp.eq.s32.totalorder %s21, 1
      %p107 = por %p105, %p106
      %p109 = scmp.ne.s32.totalorder %s94, %s108
      %p110 = scmp.eq.s32.totalorder %s21, 0
      %p111 = por %p109, %p110
      %s113 = sadd.s32 %s112, 1
      %p116 = scmp.eq.s32.totalorder %s15, 1
      %p117 = scmp.ne.s32.totalorder %s112, %s114
      %p118 = scmp.eq.s32.totalorder %s15, 0
      %p119 = por %p117, %p118
      %p120 = scmp.ne.s32.totalorder %s112, %s114
      %p121 = scmp.eq.s32.totalorder %s20, 1
      %p122 = por %p120, %p121
      %p123 = scmp.ne.s32.totalorder %s114, %s115
      %p124 = scmp.eq.s32.totalorder %s20, 0
      %p125 = por %p123, %p124
      %p126 = scmp.ne.s32.totalorder %s114, %s115
      %p127 = scmp.eq.s32.totalorder %s21, 1
      %p128 = por %p126, %p127
      %p130 = scmp.ne.s32.totalorder %s115, %s129
      %p131 = scmp.eq.s32.totalorder %s21, 0
      %p132 = por %p130, %p131
      %s134 = sadd.s32 %s133, 1
      %p137 = scmp.eq.s32.totalorder %s15, 1
      %p138 = scmp.ne.s32.totalorder %s133, %s135
      %p139 = scmp.eq.s32.totalorder %s15, 0
      %p140 = por %p138, %p139
      %p141 = scmp.ne.s32.totalorder %s133, %s135
      %p142 = scmp.eq.s32.totalorder %s20, 1
      %p143 = por %p141, %p142
      %p144 = scmp.ne.s32.totalorder %s135, %s136
      %p145 = scmp.eq.s32.totalorder %s20, 0
      %p146 = por %p144, %p145
      %p147 = scmp.ne.s32.totalorder %s135, %s136
      %p148 = scmp.eq.s32.totalorder %s21, 1
      %p149 = por %p147, %p148
      %p151 = scmp.ne.s32.totalorder %s136, %s150
      %p152 = scmp.eq.s32.totalorder %s21, 0
      %p153 = por %p151, %p152
      %s155 = sadd.s32 %s154, 1
      %p158 = scmp.eq.s32.totalorder %s15, 1
      %p159 = scmp.ne.s32.totalorder %s154, %s156
      %p160 = scmp.eq.s32.totalorder %s15, 0
      %p161 = por %p159, %p160
      %p162 = scmp.ne.s32.totalorder %s154, %s156
      %p163 = scmp.eq.s32.totalorder %s20, 1
      %p164 = por %p162, %p163
      %p165 = scmp.ne.s32.totalorder %s156, %s157
      %p166 = scmp.eq.s32.totalorder %s20, 0
      %p167 = por %p165, %p166
      %p168 = scmp.ne.s32.totalorder %s156, %s157
      %p169 = scmp.eq.s32.totalorder %s21, 1
      %p170 = por %p168, %p169
      %p172 = scmp.ne.s32.totalorder %s157, %s171
      %p173 = scmp.eq.s32.totalorder %s21, 0
      %p174 = por %p172, %p173
      %s176 = sadd.s32 %s175, 1
      %p179 = scmp.eq.s32.totalorder %s15, 1
      %p180 = scmp.ne.s32.totalorder %s175, %s177
      %p181 = scmp.eq.s32.totalorder %s15, 0
      %p182 = por %p180, %p181
      %p183 = scmp.ne.s32.totalorder %s175, %s177
      %p184 = scmp.eq.s32.totalorder %s20, 1
      %p185 = por %p183, %p184
      %p186 = scmp.ne.s32.totalorder %s177, %s178
      %p187 = scmp.eq.s32.totalorder %s20, 0
      %p188 = por %p186, %p187
      %p189 = scmp.ne.s32.totalorder %s177, %s178
      %p190 = scmp.eq.s32.totalorder %s21, 1
      %p191 = por %p189, %p190
      %p193 = scmp.ne.s32.totalorder %s178, %s192
      %p194 = scmp.eq.s32.totalorder %s21, 0
      %p195 = por %p193, %p194
      %s197 = sadd.s32 %s196, 1
      %p200 = scmp.eq.s32.totalorder %s15, 1
      %p201 = scmp.ne.s32.totalorder %s196, %s198
      %p202 = scmp.eq.s32.totalorder %s15, 0
      %p203 = por %p201, %p202
      %p204 = scmp.ne.s32.totalorder %s196, %s198
      %p205 = scmp.eq.s32.totalorder %s20, 1
      %p206 = por %p204, %p205
      %p207 = scmp.ne.s32.totalorder %s198, %s199
      %p208 = scmp.eq.s32.totalorder %s20, 0
      %p209 = por %p207, %p208
      %p210 = scmp.ne.s32.totalorder %s198, %s199
      %p211 = scmp.eq.s32.totalorder %s21, 1
      %p212 = por %p210, %p211
      %p214 = scmp.ne.s32.totalorder %s199, %s213
      %p215 = scmp.eq.s32.totalorder %s21, 0
      %p216 = por %p214, %p215
      %s217 = ssub.s32 %s15, %s22
      %p218 = scmp.eq.s32.totalorder %s217, 0
      %s220 = sadd.s32 %s219, 1
      %s221 = scalar_select %p218, %s219, %s220
      %p224 = pneg %p218
      %p225 = scmp.eq.s32.totalorder %s15, 1
      %p226 = por %p224, %p225
      %p227 = scmp.ne.s32.totalorder %s219, %s222
      %p228 = scmp.eq.s32.totalorder %s15, 0
      %p229 = por %p227, %p228
      %p230 = scmp.ne.s32.totalorder %s219, %s222
      %p231 = scmp.eq.s32.totalorder %s20, 1
      %p232 = por %p230, %p231
      %p233 = scmp.ne.s32.totalorder %s222, %s223
      %p234 = scmp.eq.s32.totalorder %s20, 0
      %p235 = por %p233, %p234
      %p236 = scmp.ne.s32.totalorder %s222, %s223
      %p237 = scmp.eq.s32.totalorder %s21, 1
      %p238 = por %p236, %p237
      %p240 = scmp.ne.s32.totalorder %s223, %s239
      %p241 = scmp.eq.s32.totalorder %s21, 0
      %p242 = por %p240, %p241
      %p243 = scmp.le.s32.totalorder 1, %s15
      %p244 = scmp.lt.s32.totalorder %s15, 3
      %p245 = pnand %p243, %p244
      %p246 = pneg %p245
      // Predicated region
      $region9: #{tpu_custom_call.1} parent=5 // pred_check
        _
      $region10: #{tpu_custom_call.1} parent=5 // pred_check_branch
        %248 = sbr.rel (%p245) target = $region12
      $region11: #{tpu_custom_call.1} parent=5 // pred_region
        %s249 = ssub.s32 %s15, 1
        // Predicated region
        $region13: #{tpu_custom_call.1} parent=11 // pred_check
          %p250 = pneg %p62
        $region14: #{tpu_custom_call.1} parent=11 // pred_check_branch
          %252 = sbr.rel (%p250) target = $region16
        $region15: #{tpu_custom_call.1} parent=11 // pred_region
          _
        $region16: #{tpu_custom_call.1} parent=11 // pred_fallthru
          _
        // Predicated region
        $region17: #{tpu_custom_call.1} parent=11 // pred_check
          %p253 = pneg %p83
        $region18: #{tpu_custom_call.1} parent=11 // pred_check_branch
          %255 = sbr.rel (%p253) target = $region20
        $region19: #{tpu_custom_call.1} parent=11 // pred_region
          _
        $region20: #{tpu_custom_call.1} parent=11 // pred_fallthru
          _
        // Predicated region
        $region21: #{tpu_custom_call.1} parent=11 // pred_check
          %p256 = pneg %p104
        $region22: #{tpu_custom_call.1} parent=11 // pred_check_branch
          %258 = sbr.rel (%p256) target = $region24
        $region23: #{tpu_custom_call.1} parent=11 // pred_region
          _
        $region24: #{tpu_custom_call.1} parent=11 // pred_fallthru
          _
        // Predicated region
        $region25: #{tpu_custom_call.1} parent=11 // pred_check
          %p259 = pneg %p125
        $region26: #{tpu_custom_call.1} parent=11 // pred_check_branch
          %261 = sbr.rel (%p259) target = $region28
        $region27: #{tpu_custom_call.1} parent=11 // pred_region
          _
        $region28: #{tpu_custom_call.1} parent=11 // pred_fallthru
          _
        // Predicated region
        $region29: #{tpu_custom_call.1} parent=11 // pred_check
          %p262 = pneg %p146
        $region30: #{tpu_custom_call.1} parent=11 // pred_check_branch
          %264 = sbr.rel (%p262) target = $region32
        $region31: #{tpu_custom_call.1} parent=11 // pred_region
          _
        $region32: #{tpu_custom_call.1} parent=11 // pred_fallthru
          _
        // Predicated region
        $region33: #{tpu_custom_call.1} parent=11 // pred_check
          %p265 = pneg %p167
        $region34: #{tpu_custom_call.1} parent=11 // pred_check_branch
          %267 = sbr.rel (%p265) target = $region36
        $region35: #{tpu_custom_call.1} parent=11 // pred_region
          _
        $region36: #{tpu_custom_call.1} parent=11 // pred_fallthru
          _
        // Predicated region
        $region37: #{tpu_custom_call.1} parent=11 // pred_check
          %p268 = pneg %p188
        $region38: #{tpu_custom_call.1} parent=11 // pred_check_branch
          %270 = sbr.rel (%p268) target = $region40
        $region39: #{tpu_custom_call.1} parent=11 // pred_region
          _
        $region40: #{tpu_custom_call.1} parent=11 // pred_fallthru
          _
        // Predicated region
        $region41: #{tpu_custom_call.1} parent=11 // pred_check
          %p271 = pneg %p209
        $region42: #{tpu_custom_call.1} parent=11 // pred_check_branch
          %273 = sbr.rel (%p271) target = $region44
        $region43: #{tpu_custom_call.1} parent=11 // pred_region
          _
        $region44: #{tpu_custom_call.1} parent=11 // pred_fallthru
          _
      $region12: #{tpu_custom_call.1} parent=5 // pred_fallthru
        _
      %p274 = scmp.lt.s32.totalorder %s15, 2
      // Predicated region
      $region45: #{tpu_custom_call.1} parent=5 // pred_check
        %p275 = pneg %p274
      $region46: #{tpu_custom_call.1} parent=5 // pred_check_branch
        %277 = sbr.rel (%p275) target = $region48
      $region47: #{tpu_custom_call.1} parent=5 // pred_region
        // Predicated region
        $region49: #{tpu_custom_call.1} parent=47 // pred_check
          %p278 = pneg %p35
        $region50: #{tpu_custom_call.1} parent=47 // pred_check_branch
          %280 = sbr.rel (%p278) target = $region52
        $region51: #{tpu_custom_call.1} parent=47 // pred_region
          %s281 = smul.u32 2, %s15
          %p282 = scmp.lt.s32.totalorder %s281, 3
          %s283 = scalar_select %p282, %s281, 3
          %s284 = smul.addr %s283, 4
          %s285 = scalar_lea.vmem %s0, %s284
          %s286 = smul.u32 2, %s15
        $region52: #{tpu_custom_call.1} parent=47 // pred_fallthru
          _
      $region48: #{tpu_custom_call.1} parent=5 // pred_fallthru
        _
      %p287 = scmp.le.s32.totalorder 1, %s15
      %p288 = scmp.lt.s32.totalorder %s15, 3
      %p289 = pnand %p287, %p288
      %p290 = pneg %p289
      // Predicated region
      $region53: #{tpu_custom_call.1} parent=5 // pred_check
        _
      $region54: #{tpu_custom_call.1} parent=5 // pred_check_branch
        %292 = sbr.rel (%p289) target = $region56
      $region55: #{tpu_custom_call.1} parent=5 // pred_region
        %s293 = ssub.s32 %s15, 1
        %s294 = smul.u32 2, %s20
        %p295 = scmp.lt.s32.totalorder %s294, 3
        %s296 = scalar_select %p295, %s294, 3
        %s297 = smul.addr %s296, 4
        %s298 = scalar_lea.vmem %s0, %s297
        %p299 = pneg %p41
        %p300 = pneg %p38
        %p301 = pneg %p62
        %p302 = pneg %p59
        %p303 = pneg %p83
        %p304 = pneg %p80
        %p305 = pneg %p104
        %p306 = pneg %p101
        %p307 = pneg %p125
        %p308 = pneg %p122
        %p309 = pneg %p146
        %p310 = pneg %p143
        %p311 = pneg %p167
        %p312 = pneg %p164
        %p313 = pneg %p188
        %p314 = pneg %p185
        %p315 = pneg %p209
        %p316 = pneg %p206
        %p317 = pneg %p235
        %p318 = pneg %p232
        %s319 = sand.u32 %s222, 1
        %s320 = sand.u32 %s222, 1
        %s321 = smul.addr %s320, 64
        %s322 = scalar_lea.vmem [#allocation2], %s321
        %s323 = smul.u32 2, %s20
        %p324 = scmp.lt.s32.totalorder %s323, 3
        %s325 = scalar_select %p324, %s323, 3
        %s326 = smul.addr %s325, 4
        %s327 = scalar_lea.vmem %s0, %s326
        %s328 = smul.u32 2, %s20
        %v329 = vld [vmem:[%s327] sm:$0xff]
        %v330 = vld [vmem:[%s1] sm:$0x3]
        %v331 = vld [vmem:[%s2] sm:$0x3]
        %v332 = vld [vmem:[%s3] sm:$0xff]
        %v334 = vcombine.high %v329, %v329
        %vm335 = vcmask 31744
        %v337 = vsel %vm335, %v332, 0
        %vm339 = vcmask 1043456
        %v340 = vsel %vm339, %v329, 0
        %v342 = vsel %vm339, %v334, 0
        %344 = vmatprep.subr.mxu0 %v342
        %345 = vmatpush1.msra.mxu0 %v340
        %346 = vmatprep.subr.mxu0 0.0
        %347 = vmatpush1.msra.mxu0 0.0
        %348 = vmatprep.subr.mxu0 0.0
        %349 = vmatpush1.msra.mxu0 0.0
        %350 = vmatprep.subr.mxu0 0.0
        %351 = vmatpush1.msra.mxu0 0.0
        %352 = vmatprep.subr.mxu0 0.0
        %353 = vmatpush1.msra.mxu0 0.0
        %354 = vmatprep.subr.mxu0 0.0
        %355 = vmatpush1.msra.mxu0 0.0
        %356 = vmatprep.subr.mxu0 0.0
        %357 = vmatpush1.msra.mxu0 0.0
        %358 = vmatprep.subr.mxu0 0.0
        %359 = vmatpush1.msra.mxu0 0.0
        %360 = vmatprep.subr.mxu0 0.0
        %361 = vmatpush1.msra.mxu0 0.0
        %362 = vmatprep.subr.mxu0 0.0
        %363 = vmatpush1.msra.mxu0 0.0
        %364 = vmatprep.subr.mxu0 0.0
        %365 = vmatpush1.msra.mxu0 0.0
        %366 = vmatprep.subr.mxu0 0.0
        %367 = vmatpush1.msra.mxu0 0.0
        %368 = vmatprep.subr.mxu0 0.0
        %369 = vmatpush1.msra.mxu0 0.0
        %370 = vmatprep.subr.mxu0 0.0
        %371 = vmatpush1.msra.mxu0 0.0
        %372 = vmatprep.subr.mxu0 0.0
        %373 = vmatpush1.msra.mxu0 0.0
        %374 = vmatprep.subr.mxu0 0.0
        %375 = vmatpush1.msra.mxu0 0.0
        %376 = vmatprep.subr.mxu0 0.0
        %377 = vmatpush1.msra.mxu0 0.0
        %378 = vmatprep.subr.mxu0 0.0
        %379 = vmatpush1.msra.mxu0 0.0
        %380 = vmatprep.subr.mxu0 0.0
        %381 = vmatpush1.msra.mxu0 0.0
        %382 = vmatprep.subr.mxu0 0.0
        %383 = vmatpush1.msra.mxu0 0.0
        %384 = vmatprep.subr.mxu0 0.0
        %385 = vmatpush1.msra.mxu0 0.0
        %386 = vmatprep.subr.mxu0 0.0
        %387 = vmatpush1.msra.mxu0 0.0
        %388 = vmatprep.subr.mxu0 0.0
        %389 = vmatpush1.msra.mxu0 0.0
        %390 = vmatprep.subr.mxu0 0.0
        %391 = vmatpush1.msra.mxu0 0.0
        %392 = vmatprep.subr.mxu0 0.0
        %393 = vmatpush1.msra.mxu0 0.0
        %394 = vmatprep.subr.mxu0 0.0
        %395 = vmatpush1.msra.mxu0 0.0
        %396 = vmatprep.subr.mxu0 0.0
        %397 = vmatpush1.msra.mxu0 0.0
        %398 = vmatprep.subr.mxu0 0.0
        %399 = vmatpush1.msra.mxu0 0.0
        %400 = vmatprep.subr.mxu0 0.0
        %401 = vmatpush1.msra.mxu0 0.0
        %402 = vmatprep.subr.mxu0 0.0
        %403 = vmatpush1.msra.mxu0 0.0
        %404 = vmatprep.subr.mxu0 0.0
        %405 = vmatpush1.msra.mxu0 0.0
        %406 = vmatprep.subr.mxu0 0.0
        %407 = vmatpush1.msra.mxu0 0.0
        %408 = vmatprep.mubr.f32.mxu0 0.0
        %409 = vmatmul.mubr.f32.gmra.mrb[0].mxu0 %v337
        %v410 = vpop.f32.mrb[0].mxu0
        %v411 = vadd.f32 0.0, %v410
        %v412 = vpop.f32.mrb[0].mxu0
        %v413 = vadd.f32 0.0, %v412
        %414 = vdwg.mxu0
        %v415 = vmax.f32 %v411, 0.0
        %v416 = vmax.f32 %v413, 0.0
        %v417 = vld [vmem:[%s4] sm:$0xf]
        %419 = vset.pattern.permute.xlu0 4
        %420 = vperm.xlu0 %419, %v417
        %v421 = vpop.permute.xlu0 %420
        %v423 = vunpack.c.l.s4 839922192
        %v424 = vunpack.c.0.s8 %v423
        %v425 = vlaneseq
        %v426 = vshrl.u32 %v425, 7
        %v427 = vsub.s32 %v424, %v426
        %v428 = vrot.slane %v421, %v427
        %v430 = vmul.f32 %v329, %v428
        %432 = vrot.lane.b32.xlu0 %v329, 17
        %v433 = vpop.permute.xlu0 %432
        %434 = vrot.lane.b32.xlu0 %v334, 17
        %v435 = vpop.permute.xlu0 %434
        %v436 = vlaneseq
        %v437 = vand.u32 %v436, 127
        %vm438 = vcmp.lt.s32.totalorder %v437, 17
        %v439 = vsel %vm438, %v433, %v435
        %v440 = vsel %vm438, %v435, %v433
        %vm441 = vcmp.ge.s32.totalorder %v330, 1
        %vm442 = vcmp.ge.s32.totalorder %v331, 1
        %vm443 = vmand %vm441, %vm442
        %v444 = vsel %vm443, 1, 0
        %v445 = vlaneseq
        %v446 = vshrl.u32 %v445, 7
        %v447 = vsub.s32 0, %v446
        %v448 = vrot.slane %v444, %v447
        %v449 = vlaneseq
        %v450 = vshrl.u32 %v449, 7
        %v451 = vsub.s32 1, %v450
        %v452 = vrot.slane %v444, %v451
        %vm453 = vcmp.eq.s32.totalorder %v448, 1
        %vm454 = vcmp.eq.s32.totalorder %v452, 1
        %v455 = vsel %vm453, %v440, 0.0
        %v456 = vsel %vm454, %v439, 0.0
        %457 = vset.pattern.permute.xlu0 0
        %458 = vperm.xlu0 %457, %v417
        %v459 = vpop.permute.xlu0 %458
        %v461 = vmul.f32 %v455, %v459
        %v462 = vmul.f32 %v456, %v459
        %v465 = vcombine.low %v461, %v462
        %v467 = vadd.f32 %v430, %v465
        %468 = vrot.lane.b32.xlu0 %v329, 16
        %v469 = vpop.permute.xlu0 %468
        %470 = vrot.lane.b32.xlu0 %v334, 16
        %v471 = vpop.permute.xlu0 %470
        %vm472 = vcmp.lt.s32.totalorder %v437, 16
        %v473 = vsel %vm472, %v469, %v471
        %v474 = vsel %vm472, %v471, %v469
        %v475 = vsel %vm441, 1, 0
        %v476 = vlaneseq
        %v477 = vshrl.u32 %v476, 7
        %v478 = vsub.s32 0, %v477
        %v479 = vrot.slane %v475, %v478
        %v480 = vlaneseq
        %v481 = vshrl.u32 %v480, 7
        %v482 = vsub.s32 1, %v481
        %v483 = vrot.slane %v475, %v482
        %vm484 = vcmp.eq.s32.totalorder %v479, 1
        %vm485 = vcmp.eq.s32.totalorder %v483, 1
        %v486 = vsel %vm484, %v474, 0.0
        %v487 = vsel %vm485, %v473, 0.0
        %488 = vset.pattern.permute.xlu0 1
        %489 = vperm.xlu0 %488, %v417
        %v490 = vpop.permute.xlu0 %489
        %v492 = vmul.f32 %v486, %v490
        %v493 = vmul.f32 %v487, %v490
        %v496 = vcombine.low %v492, %v493
        %v498 = vadd.f32 %v467, %v496
        %499 = vrot.lane.b32.xlu0 %v329, 15
        %v500 = vpop.permute.xlu0 %499
        %501 = vrot.lane.b32.xlu0 %v334, 15
        %v502 = vpop.permute.xlu0 %501
        %vm503 = vcmp.lt.s32.totalorder %v437, 15
        %v504 = vsel %vm503, %v500, %v502
        %v505 = vsel %vm503, %v502, %v500
        %vm506 = vcmp.lt.s32.totalorder %v331, 15
        %vm507 = vmand %vm441, %vm506
        %v508 = vsel %vm507, 1, 0
        %v509 = vlaneseq
        %v510 = vshrl.u32 %v509, 7
        %v511 = vsub.s32 0, %v510
        %v512 = vrot.slane %v508, %v511
        %v513 = vlaneseq
        %v514 = vshrl.u32 %v513, 7
        %v515 = vsub.s32 1, %v514
        %v516 = vrot.slane %v508, %v515
        %vm517 = vcmp.eq.s32.totalorder %v512, 1
        %vm518 = vcmp.eq.s32.totalorder %v516, 1
        %v519 = vsel %vm517, %v505, 0.0
        %v520 = vsel %vm518, %v504, 0.0
        %521 = vset.pattern.permute.xlu0 2
        %522 = vperm.xlu0 %521, %v417
        %v523 = vpop.permute.xlu0 %522
        %v525 = vmul.f32 %v519, %v523
        %v526 = vmul.f32 %v520, %v523
        %v529 = vcombine.low %v525, %v526
        %v531 = vadd.f32 %v498, %v529
        %532 = vrot.lane.b32.xlu0 %v329, 1
        %v533 = vpop.permute.xlu0 %532
        %534 = vrot.lane.b32.xlu0 %v334, 1
        %v535 = vpop.permute.xlu0 %534
        %vm536 = vcmp.lt.s32.totalorder %v437, 1
        %v537 = vsel %vm536, %v533, %v535
        %v538 = vsel %vm536, %v535, %v533
        %v539 = vsel %vm442, 1, 0
        %v540 = vlaneseq
        %v541 = vshrl.u32 %v540, 7
        %v542 = vsub.s32 0, %v541
        %v543 = vrot.slane %v539, %v542
        %v544 = vlaneseq
        %v545 = vshrl.u32 %v544, 7
        %v546 = vsub.s32 1, %v545
        %v547 = vrot.slane %v539, %v546
        %vm548 = vcmp.eq.s32.totalorder %v543, 1
        %vm549 = vcmp.eq.s32.totalorder %v547, 1
        %v550 = vsel %vm548, %v538, 0.0
        %v551 = vsel %vm549, %v537, 0.0
        %552 = vset.pattern.permute.xlu0 3
        %553 = vperm.xlu0 %552, %v417
        %v554 = vpop.permute.xlu0 %553
        %v556 = vmul.f32 %v550, %v554
        %v557 = vmul.f32 %v551, %v554
        %v560 = vcombine.low %v556, %v557
        %v562 = vadd.f32 %v531, %v560
        %563 = vrot.lane.b32.xlu0 %v329, 127
        %v564 = vpop.permute.xlu0 %563
        %565 = vrot.lane.b32.xlu0 %v334, 127
        %v566 = vpop.permute.xlu0 %565
        %vm567 = vcmp.lt.s32.totalorder %v437, 127
        %v568 = vsel %vm567, %v564, %v566
        %v569 = vsel %vm567, %v566, %v564
        %v570 = vsel %vm506, 1, 0
        %v571 = vlaneseq
        %v572 = vshrl.u32 %v571, 7
        %v573 = vsub.s32 0, %v572
        %v574 = vrot.slane %v570, %v573
        %v575 = vlaneseq
        %v576 = vshrl.u32 %v575, 7
        %v577 = vsub.s32 1, %v576
        %v578 = vrot.slane %v570, %v577
        %vm579 = vcmp.eq.s32.totalorder %v574, 1
        %vm580 = vcmp.eq.s32.totalorder %v578, 1
        %v581 = vsel %vm579, %v568, 0.0
        %v582 = vsel %vm580, %v569, 0.0
        %583 = vset.pattern.permute.xlu0 5
        %584 = vperm.xlu0 %583, %v417
        %v585 = vpop.permute.xlu0 %584
        %v587 = vmul.f32 %v581, %v585
        %v588 = vmul.f32 %v582, %v585
        %v591 = vcombine.low %v587, %v588
        %v593 = vadd.f32 %v562, %v591
        %594 = vrot.lane.b32.xlu0 %v329, 113
        %v595 = vpop.permute.xlu0 %594
        %596 = vrot.lane.b32.xlu0 %v334, 113
        %v597 = vpop.permute.xlu0 %596
        %vm598 = vcmp.lt.s32.totalorder %v437, 113
        %v599 = vsel %vm598, %v595, %v597
        %v600 = vsel %vm598, %v597, %v595
        %vm601 = vcmp.lt.s32.totalorder %v330, 15
        %vm602 = vmand %vm601, %vm442
        %v603 = vsel %vm602, 1, 0
        %v604 = vlaneseq
        %v605 = vshrl.u32 %v604, 7
        %v606 = vsub.s32 0, %v605
        %v607 = vrot.slane %v603, %v606
        %v608 = vlaneseq
        %v609 = vshrl.u32 %v608, 7
        %v610 = vsub.s32 1, %v609
        %v611 = vrot.slane %v603, %v610
        %vm612 = vcmp.eq.s32.totalorder %v607, 1
        %vm613 = vcmp.eq.s32.totalorder %v611, 1
        %v614 = vsel %vm612, %v599, 0.0
        %v615 = vsel %vm613, %v600, 0.0
        %616 = vset.pattern.permute.xlu0 6
        %617 = vperm.xlu0 %616, %v417
        %v618 = vpop.permute.xlu0 %617
        %v620 = vmul.f32 %v614, %v618
        %v621 = vmul.f32 %v615, %v618
        %v624 = vcombine.low %v620, %v621
        %v626 = vadd.f32 %v593, %v624
        %627 = vrot.lane.b32.xlu0 %v329, 112
        %v628 = vpop.permute.xlu0 %627
        %629 = vrot.lane.b32.xlu0 %v334, 112
        %v630 = vpop.permute.xlu0 %629
        %vm631 = vcmp.lt.s32.totalorder %v437, 112
        %v632 = vsel %vm631, %v628, %v630
        %v633 = vsel %vm631, %v630, %v628
        %v634 = vsel %vm601, 1, 0
        %v635 = vlaneseq
        %v636 = vshrl.u32 %v635, 7
        %v637 = vsub.s32 0, %v636
        %v638 = vrot.slane %v634, %v637
        %v639 = vlaneseq
        %v640 = vshrl.u32 %v639, 7
        %v641 = vsub.s32 1, %v640
        %v642 = vrot.slane %v634, %v641
        %vm643 = vcmp.eq.s32.totalorder %v638, 1
        %vm644 = vcmp.eq.s32.totalorder %v642, 1
        %v645 = vsel %vm643, %v632, 0.0
        %v646 = vsel %vm644, %v633, 0.0
        %647 = vset.pattern.permute.xlu0 7
        %648 = vperm.xlu0 %647, %v417
        %v649 = vpop.permute.xlu0 %648
        %v651 = vmul.f32 %v645, %v649
        %v652 = vmul.f32 %v646, %v649
        %v655 = vcombine.low %v651, %v652
        %v657 = vadd.f32 %v626, %v655
        %658 = vrot.lane.b32.xlu0 %v329, 111
        %v659 = vpop.permute.xlu0 %658
        %660 = vrot.lane.b32.xlu0 %v334, 111
        %v661 = vpop.permute.xlu0 %660
        %vm662 = vcmp.lt.s32.totalorder %v437, 111
        %v663 = vsel %vm662, %v659, %v661
        %v664 = vsel %vm662, %v661, %v659
        %vm665 = vmand %vm601, %vm506
        %v666 = vsel %vm665, 1, 0
        %v667 = vlaneseq
        %v668 = vshrl.u32 %v667, 7
        %v669 = vsub.s32 0, %v668
        %v670 = vrot.slane %v666, %v669
        %v671 = vlaneseq
        %v672 = vshrl.u32 %v671, 7
        %v673 = vsub.s32 1, %v672
        %v674 = vrot.slane %v666, %v673
        %vm675 = vcmp.eq.s32.totalorder %v670, 1
        %vm676 = vcmp.eq.s32.totalorder %v674, 1
        %v677 = vsel %vm675, %v663, 0.0
        %v678 = vsel %vm676, %v664, 0.0
        %679 = vset.pattern.permute.xlu0 8
        %680 = vperm.xlu0 %679, %v417
        %v681 = vpop.permute.xlu0 %680
        %v683 = vmul.f32 %v677, %v681
        %v684 = vmul.f32 %v678, %v681
        %v687 = vcombine.low %v683, %v684
        %v689 = vadd.f32 %v657, %v687
        %v690 = vld [vmem:[%s5] sm:$0xf]
        %692 = vset.pattern.permute.xlu0 0
        %693 = vperm.xlu0 %692, %v690
        %v694 = vpop.permute.xlu0 %693
        %v696 = vunpack.c.l.s4 839922192
        %v697 = vunpack.c.0.s8 %v696
        %v698 = vlaneseq
        %v699 = vshrl.u32 %v698, 7
        %v700 = vsub.s32 %v697, %v699
        %v701 = vrot.slane %v694, %v700
        %v703 = vadd.f32 %v689, %v701
        %v704 = vld [vmem:[%s6] sm:$0xff]
        %v705 = vld [vmem:[%s7] sm:$0xff]
        %707 = vset.pattern.permute.xlu0 0
        %708 = vperm.xlu0 %707, %v705
        %v709 = vpop.permute.xlu0 %708
        %v712 = vcombine.high %v703, %v703
        %v714 = vsel %vm335, %v704, 0
        %v716 = vsel %vm339, %v703, 0
        %v718 = vsel %vm339, %v712, 0
        %720 = vmatprep.subr.mxu0 %v718
        %721 = vmatpush1.msra.mxu0 %v716
        %722 = vmatprep.subr.mxu0 0.0
        %723 = vmatpush1.msra.mxu0 0.0
        %724 = vmatprep.subr.mxu0 0.0
        %725 = vmatpush1.msra.mxu0 0.0
        %726 = vmatprep.subr.mxu0 0.0
        %727 = vmatpush1.msra.mxu0 0.0
        %728 = vmatprep.subr.mxu0 0.0
        %729 = vmatpush1.msra.mxu0 0.0
        %730 = vmatprep.subr.mxu0 0.0
        %731 = vmatpush1.msra.mxu0 0.0
        %732 = vmatprep.subr.mxu0 0.0
        %733 = vmatpush1.msra.mxu0 0.0
        %734 = vmatprep.subr.mxu0 0.0
        %735 = vmatpush1.msra.mxu0 0.0
        %736 = vmatprep.subr.mxu0 0.0
        %737 = vmatpush1.msra.mxu0 0.0
        %738 = vmatprep.subr.mxu0 0.0
        %739 = vmatpush1.msra.mxu0 0.0
        %740 = vmatprep.subr.mxu0 0.0
        %741 = vmatpush1.msra.mxu0 0.0
        %742 = vmatprep.subr.mxu0 0.0
        %743 = vmatpush1.msra.mxu0 0.0
        %744 = vmatprep.subr.mxu0 0.0
        %745 = vmatpush1.msra.mxu0 0.0
        %746 = vmatprep.subr.mxu0 0.0
        %747 = vmatpush1.msra.mxu0 0.0
        %748 = vmatprep.subr.mxu0 0.0
        %749 = vmatpush1.msra.mxu0 0.0
        %750 = vmatprep.subr.mxu0 0.0
        %751 = vmatpush1.msra.mxu0 0.0
        %752 = vmatprep.subr.mxu0 0.0
        %753 = vmatpush1.msra.mxu0 0.0
        %754 = vmatprep.subr.mxu0 0.0
        %755 = vmatpush1.msra.mxu0 0.0
        %756 = vmatprep.subr.mxu0 0.0
        %757 = vmatpush1.msra.mxu0 0.0
        %758 = vmatprep.subr.mxu0 0.0
        %759 = vmatpush1.msra.mxu0 0.0
        %760 = vmatprep.subr.mxu0 0.0
        %761 = vmatpush1.msra.mxu0 0.0
        %762 = vmatprep.subr.mxu0 0.0
        %763 = vmatpush1.msra.mxu0 0.0
        %764 = vmatprep.subr.mxu0 0.0
        %765 = vmatpush1.msra.mxu0 0.0
        %766 = vmatprep.subr.mxu0 0.0
        %767 = vmatpush1.msra.mxu0 0.0
        %768 = vmatprep.subr.mxu0 0.0
        %769 = vmatpush1.msra.mxu0 0.0
        %770 = vmatprep.subr.mxu0 0.0
        %771 = vmatpush1.msra.mxu0 0.0
        %772 = vmatprep.subr.mxu0 0.0
        %773 = vmatpush1.msra.mxu0 0.0
        %774 = vmatprep.subr.mxu0 0.0
        %775 = vmatpush1.msra.mxu0 0.0
        %776 = vmatprep.subr.mxu0 0.0
        %777 = vmatpush1.msra.mxu0 0.0
        %778 = vmatprep.subr.mxu0 0.0
        %779 = vmatpush1.msra.mxu0 0.0
        %780 = vmatprep.subr.mxu0 0.0
        %781 = vmatpush1.msra.mxu0 0.0
        %782 = vmatprep.subr.mxu0 0.0
        %783 = vmatpush1.msra.mxu0 0.0
        %784 = vmatprep.mubr.f32.mxu0 0.0
        %785 = vmatmul.mubr.f32.gmra.mrb[0].mxu0 %v714
        %v786 = vpop.f32.mrb[0].mxu0
        %v787 = vadd.f32 %v709, %v786
        %v788 = vpop.f32.mrb[0].mxu0
        %v789 = vadd.f32 %v709, %v788
        %790 = vdwg.mxu0
        %v791 = vsub.f32 0.0, %v787
        %v792 = vsub.f32 0.0, %v789
        %v793 = vmul.f32 %v791, 1.442695
        %v794 = vpow.pop %v793
        %v795 = vmul.f32 %v792, 1.442695
        %v796 = vpow.pop %v795
        %v797 = vadd.f32 %v794, 1.0
        %v798 = vadd.f32 %v796, 1.0
        %v799 = vrcp.pop %v797
        %v800 = vrcp.pop %v798
        %v801 = vmul.f32 %v799, %v415
        %v802 = vmul.f32 %v800, %v416
        %803 = vrot.lane.b32.xlu0 %v801, 16
        %v804 = vpop.permute.xlu0 %803
        %805 = vrot.lane.b32.xlu0 %v799, 16
        %v806 = vpop.permute.xlu0 %805
        %807 = vrot.lane.b32.xlu0 %v802, 16
        %v808 = vpop.permute.xlu0 %807
        %809 = vrot.lane.b32.xlu0 %v800, 16
        %v810 = vpop.permute.xlu0 %809
        %v811 = vsel %vm472, %v804, %v808
        %v812 = vsel %vm472, %v806, %v810
        %v813 = vsel %vm472, %v808, %v804
        %v814 = vsel %vm472, %v810, %v806
        %v815 = vsel %vm484, %v813, 0.0
        %v816 = vsel %vm485, %v811, 0.0
        %v817 = vsel %vm484, %v814, 0.0
        %v818 = vsel %vm485, %v812, 0.0
        %v819 = vadd.f32 %v801, %v815
        %v820 = vadd.f32 %v802, %v816
        %v821 = vadd.f32 %v799, %v817
        %v822 = vadd.f32 %v800, %v818
        %823 = vrot.lane.b32.xlu0 %v801, 112
        %v824 = vpop.permute.xlu0 %823
        %825 = vrot.lane.b32.xlu0 %v799, 112
        %v826 = vpop.permute.xlu0 %825
        %827 = vrot.lane.b32.xlu0 %v802, 112
        %v828 = vpop.permute.xlu0 %827
        %829 = vrot.lane.b32.xlu0 %v800, 112
        %v830 = vpop.permute.xlu0 %829
        %v831 = vsel %vm631, %v824, %v828
        %v832 = vsel %vm631, %v826, %v830
        %v833 = vsel %vm631, %v828, %v824
        %v834 = vsel %vm631, %v830, %v826
        %v835 = vsel %vm643, %v831, 0.0
        %v836 = vsel %vm644, %v833, 0.0
        %v837 = vsel %vm643, %v832, 0.0
        %v838 = vsel %vm644, %v834, 0.0
        %v839 = vadd.f32 %v819, %v835
        %v840 = vadd.f32 %v820, %v836
        %v841 = vadd.f32 %v821, %v837
        %v842 = vadd.f32 %v822, %v838
        %v845 = vcombine.high %v839, %v839
        %v847 = vunpack.c.l.s4 1966171168
        %v848 = vunpack.c.0.s8 %v847
        %v849 = vlaneseq
        %v850 = vshrl.u32 %v849, 7
        %v851 = vsub.s32 %v848, %v850
        %v852 = vrot.slane %v839, %v851
        %v854 = vunpack.c.l.s4 1966171168
        %v855 = vunpack.c.0.s8 %v854
        %v856 = vlaneseq
        %v857 = vshrl.u32 %v856, 7
        %v858 = vsub.s32 %v855, %v857
        %v859 = vrot.slane %v845, %v858
        %v860 = vcombine.high %v852, %v852
        %v861 = vcombine.high %v859, %v859
        %v863 = vunpack.c.l.s4 1966171168
        %v864 = vunpack.c.0.s8 %v863
        %v865 = vlaneseq
        %v866 = vshrl.u32 %v865, 7
        %v867 = vsub.s32 %v864, %v866
        %v868 = vrot.slane %v852, %v867
        %v870 = vunpack.c.l.s4 1966171168
        %v871 = vunpack.c.0.s8 %v870
        %v872 = vlaneseq
        %v873 = vshrl.u32 %v872, 7
        %v874 = vsub.s32 %v871, %v873
        %v875 = vrot.slane %v859, %v874
        %v877 = vunpack.c.l.s4 1966171168
        %v878 = vunpack.c.0.s8 %v877
        %v879 = vlaneseq
        %v880 = vshrl.u32 %v879, 7
        %v881 = vsub.s32 %v878, %v880
        %v882 = vrot.slane %v860, %v881
        %v884 = vunpack.c.l.s4 1966171168
        %v885 = vunpack.c.0.s8 %v884
        %v886 = vlaneseq
        %v887 = vshrl.u32 %v886, 7
        %v888 = vsub.s32 %v885, %v887
        %v889 = vrot.slane %v861, %v888
        %v890 = vcombine.high %v868, %v868
        %v891 = vcombine.high %v875, %v875
        %v892 = vcombine.high %v882, %v882
        %v893 = vcombine.high %v889, %v889
        %v894 = vcombine.high %v841, %v841
        %v896 = vunpack.c.l.s4 1966171168
        %v897 = vunpack.c.0.s8 %v896
        %v898 = vlaneseq
        %v899 = vshrl.u32 %v898, 7
        %v900 = vsub.s32 %v897, %v899
        %v901 = vrot.slane %v841, %v900
        %v903 = vunpack.c.l.s4 1966171168
        %v904 = vunpack.c.0.s8 %v903
        %v905 = vlaneseq
        %v906 = vshrl.u32 %v905, 7
        %v907 = vsub.s32 %v904, %v906
        %v908 = vrot.slane %v894, %v907
        %v909 = vcombine.high %v901, %v901
        %v910 = vcombine.high %v908, %v908
        %v912 = vunpack.c.l.s4 1966171168
        %v913 = vunpack.c.0.s8 %v912
        %v914 = vlaneseq
        %v915 = vshrl.u32 %v914, 7
        %v916 = vsub.s32 %v913, %v915
        %v917 = vrot.slane %v901, %v916
        %v919 = vunpack.c.l.s4 1966171168
        %v920 = vunpack.c.0.s8 %v919
        %v921 = vlaneseq
        %v922 = vshrl.u32 %v921, 7
        %v923 = vsub.s32 %v920, %v922
        %v924 = vrot.slane %v908, %v923
        %v926 = vunpack.c.l.s4 1966171168
        %v927 = vunpack.c.0.s8 %v926
        %v928 = vlaneseq
        %v929 = vshrl.u32 %v928, 7
        %v930 = vsub.s32 %v927, %v929
        %v931 = vrot.slane %v909, %v930
        %v933 = vunpack.c.l.s4 1966171168
        %v934 = vunpack.c.0.s8 %v933
        %v935 = vlaneseq
        %v936 = vshrl.u32 %v935, 7
        %v937 = vsub.s32 %v934, %v936
        %v938 = vrot.slane %v910, %v937
        %v939 = vcombine.high %v917, %v917
        %v940 = vcombine.high %v924, %v924
        %v941 = vcombine.high %v931, %v931
        %v942 = vcombine.high %v938, %v938
        %v961 = vcombine.high %v840, %v840
        %v963 = vunpack.c.l.s4 1966171168
        %v964 = vunpack.c.0.s8 %v963
        %v965 = vlaneseq
        %v966 = vshrl.u32 %v965, 7
        %v967 = vsub.s32 %v964, %v966
        %v968 = vrot.slane %v840, %v967
        %v970 = vunpack.c.l.s4 1966171168
        %v971 = vunpack.c.0.s8 %v970
        %v972 = vlaneseq
        %v973 = vshrl.u32 %v972, 7
        %v974 = vsub.s32 %v971, %v973
        %v975 = vrot.slane %v961, %v974
        %v976 = vcombine.high %v968, %v968
        %v977 = vcombine.high %v975, %v975
        %v979 = vunpack.c.l.s4 1966171168
        %v980 = vunpack.c.0.s8 %v979
        %v981 = vlaneseq
        %v982 = vshrl.u32 %v981, 7
        %v983 = vsub.s32 %v980, %v982
        %v984 = vrot.slane %v968, %v983
        %v986 = vunpack.c.l.s4 1966171168
        %v987 = vunpack.c.0.s8 %v986
        %v988 = vlaneseq
        %v989 = vshrl.u32 %v988, 7
        %v990 = vsub.s32 %v987, %v989
        %v991 = vrot.slane %v975, %v990
        %v993 = vunpack.c.l.s4 1966171168
        %v994 = vunpack.c.0.s8 %v993
        %v995 = vlaneseq
        %v996 = vshrl.u32 %v995, 7
        %v997 = vsub.s32 %v994, %v996
        %v998 = vrot.slane %v976, %v997
        %v1000 = vunpack.c.l.s4 1966171168
        %v1001 = vunpack.c.0.s8 %v1000
        %v1002 = vlaneseq
        %v1003 = vshrl.u32 %v1002, 7
        %v1004 = vsub.s32 %v1001, %v1003
        %v1005 = vrot.slane %v977, %v1004
        %v1006 = vcombine.high %v984, %v984
        %v1007 = vcombine.high %v991, %v991
        %v1008 = vcombine.high %v998, %v998
        %v1009 = vcombine.high %v1005, %v1005
        %v1010 = vcombine.high %v842, %v842
        %v1012 = vunpack.c.l.s4 1966171168
        %v1013 = vunpack.c.0.s8 %v1012
        %v1014 = vlaneseq
        %v1015 = vshrl.u32 %v1014, 7
        %v1016 = vsub.s32 %v1013, %v1015
        %v1017 = vrot.slane %v842, %v1016
        %v1019 = vunpack.c.l.s4 1966171168
        %v1020 = vunpack.c.0.s8 %v1019
        %v1021 = vlaneseq
        %v1022 = vshrl.u32 %v1021, 7
        %v1023 = vsub.s32 %v1020, %v1022
        %v1024 = vrot.slane %v1010, %v1023
        %v1025 = vcombine.high %v1017, %v1017
        %v1026 = vcombine.high %v1024, %v1024
        %v1028 = vunpack.c.l.s4 1966171168
        %v1029 = vunpack.c.0.s8 %v1028
        %v1030 = vlaneseq
        %v1031 = vshrl.u32 %v1030, 7
        %v1032 = vsub.s32 %v1029, %v1031
        %v1033 = vrot.slane %v1017, %v1032
        %v1035 = vunpack.c.l.s4 1966171168
        %v1036 = vunpack.c.0.s8 %v1035
        %v1037 = vlaneseq
        %v1038 = vshrl.u32 %v1037, 7
        %v1039 = vsub.s32 %v1036, %v1038
        %v1040 = vrot.slane %v1024, %v1039
        %v1042 = vunpack.c.l.s4 1966171168
        %v1043 = vunpack.c.0.s8 %v1042
        %v1044 = vlaneseq
        %v1045 = vshrl.u32 %v1044, 7
        %v1046 = vsub.s32 %v1043, %v1045
        %v1047 = vrot.slane %v1025, %v1046
        %v1049 = vunpack.c.l.s4 1966171168
        %v1050 = vunpack.c.0.s8 %v1049
        %v1051 = vlaneseq
        %v1052 = vshrl.u32 %v1051, 7
        %v1053 = vsub.s32 %v1050, %v1052
        %v1054 = vrot.slane %v1026, %v1053
        %v1055 = vcombine.high %v1033, %v1033
        %v1056 = vcombine.high %v1040, %v1040
        %v1057 = vcombine.high %v1047, %v1047
        %v1058 = vcombine.high %v1054, %v1054
        %v1059 = vlaneseq
        %v1060 = vshrl.u32 %v1059, 7
        %v1061 = vsub.s32 0, %v1060
        %v1062 = vrot.slane %v868, %v1061
        %v1063 = vlaneseq
        %v1064 = vshrl.u32 %v1063, 7
        %v1065 = vsub.s32 0, %v1064
        %v1066 = vrot.slane %v882, %v1065
        %v1067 = vlaneseq
        %v1068 = vshrl.u32 %v1067, 7
        %v1069 = vsub.s32 0, %v1068
        %v1070 = vrot.slane %v890, %v1069
        %v1071 = vlaneseq
        %v1072 = vshrl.u32 %v1071, 7
        %v1073 = vsub.s32 0, %v1072
        %v1074 = vrot.slane %v892, %v1073
        %v1075 = vlaneseq
        %v1076 = vshrl.u32 %v1075, 7
        %v1077 = vsub.s32 0, %v1076
        %v1078 = vrot.slane %v875, %v1077
        %v1079 = vlaneseq
        %v1080 = vshrl.u32 %v1079, 7
        %v1081 = vsub.s32 0, %v1080
        %v1082 = vrot.slane %v889, %v1081
        %v1083 = vlaneseq
        %v1084 = vshrl.u32 %v1083, 7
        %v1085 = vsub.s32 0, %v1084
        %v1086 = vrot.slane %v891, %v1085
        %v1087 = vlaneseq
        %v1088 = vshrl.u32 %v1087, 7
        %v1089 = vsub.s32 0, %v1088
        %v1090 = vrot.slane %v893, %v1089
        %v1091 = vlaneseq
        %v1092 = vshrl.u32 %v1091, 7
        %v1093 = vsub.s32 0, %v1092
        %v1094 = vrot.slane %v917, %v1093
        %v1095 = vlaneseq
        %v1096 = vshrl.u32 %v1095, 7
        %v1097 = vsub.s32 0, %v1096
        %v1098 = vrot.slane %v931, %v1097
        %v1099 = vlaneseq
        %v1100 = vshrl.u32 %v1099, 7
        %v1101 = vsub.s32 0, %v1100
        %v1102 = vrot.slane %v939, %v1101
        %v1103 = vlaneseq
        %v1104 = vshrl.u32 %v1103, 7
        %v1105 = vsub.s32 0, %v1104
        %v1106 = vrot.slane %v941, %v1105
        %v1107 = vlaneseq
        %v1108 = vshrl.u32 %v1107, 7
        %v1109 = vsub.s32 0, %v1108
        %v1110 = vrot.slane %v924, %v1109
        %v1111 = vlaneseq
        %v1112 = vshrl.u32 %v1111, 7
        %v1113 = vsub.s32 0, %v1112
        %v1114 = vrot.slane %v938, %v1113
        %v1115 = vlaneseq
        %v1116 = vshrl.u32 %v1115, 7
        %v1117 = vsub.s32 0, %v1116
        %v1118 = vrot.slane %v940, %v1117
        %v1119 = vlaneseq
        %v1120 = vshrl.u32 %v1119, 7
        %v1121 = vsub.s32 0, %v1120
        %v1122 = vrot.slane %v942, %v1121
        %1123 = vrot.lane.b32.xlu0 %v1062, 96
        %v1124 = vpop.permute.xlu0 %1123
        %1125 = vrot.lane.b32.xlu0 %v1066, 96
        %v1126 = vpop.permute.xlu0 %1125
        %1127 = vrot.lane.b32.xlu0 %v1070, 96
        %v1128 = vpop.permute.xlu0 %1127
        %1129 = vrot.lane.b32.xlu0 %v1074, 96
        %v1130 = vpop.permute.xlu0 %1129
        %1131 = vrot.lane.b32.xlu0 %v1078, 96
        %v1132 = vpop.permute.xlu0 %1131
        %1133 = vrot.lane.b32.xlu0 %v1082, 96
        %v1134 = vpop.permute.xlu0 %1133
        %1135 = vrot.lane.b32.xlu0 %v1086, 96
        %v1136 = vpop.permute.xlu0 %1135
        %1137 = vrot.lane.b32.xlu0 %v1090, 96
        %v1138 = vpop.permute.xlu0 %1137
        %1139 = vrot.lane.b32.xlu0 %v1094, 96
        %v1140 = vpop.permute.xlu0 %1139
        %1141 = vrot.lane.b32.xlu0 %v1098, 96
        %v1142 = vpop.permute.xlu0 %1141
        %1143 = vrot.lane.b32.xlu0 %v1102, 96
        %v1144 = vpop.permute.xlu0 %1143
        %1145 = vrot.lane.b32.xlu0 %v1106, 96
        %v1146 = vpop.permute.xlu0 %1145
        %1147 = vrot.lane.b32.xlu0 %v1110, 96
        %v1148 = vpop.permute.xlu0 %1147
        %1149 = vrot.lane.b32.xlu0 %v1114, 96
        %v1150 = vpop.permute.xlu0 %1149
        %1151 = vrot.lane.b32.xlu0 %v1118, 96
        %v1152 = vpop.permute.xlu0 %1151
        %1153 = vrot.lane.b32.xlu0 %v1122, 96
        %v1154 = vpop.permute.xlu0 %1153
        %1171 = vrot.lane.b32.xlu0 %v1062, 64
        %v1172 = vpop.permute.xlu0 %1171
        %1173 = vrot.lane.b32.xlu0 %v1066, 64
        %v1174 = vpop.permute.xlu0 %1173
        %1175 = vrot.lane.b32.xlu0 %v1070, 64
        %v1176 = vpop.permute.xlu0 %1175
        %1177 = vrot.lane.b32.xlu0 %v1074, 64
        %v1178 = vpop.permute.xlu0 %1177
        %1179 = vrot.lane.b32.xlu0 %v1078, 64
        %v1180 = vpop.permute.xlu0 %1179
        %1181 = vrot.lane.b32.xlu0 %v1082, 64
        %v1182 = vpop.permute.xlu0 %1181
        %1183 = vrot.lane.b32.xlu0 %v1086, 64
        %v1184 = vpop.permute.xlu0 %1183
        %1185 = vrot.lane.b32.xlu0 %v1090, 64
        %v1186 = vpop.permute.xlu0 %1185
        %1187 = vrot.lane.b32.xlu0 %v1094, 64
        %v1188 = vpop.permute.xlu0 %1187
        %1189 = vrot.lane.b32.xlu0 %v1098, 64
        %v1190 = vpop.permute.xlu0 %1189
        %1191 = vrot.lane.b32.xlu0 %v1102, 64
        %v1192 = vpop.permute.xlu0 %1191
        %1193 = vrot.lane.b32.xlu0 %v1106, 64
        %v1194 = vpop.permute.xlu0 %1193
        %1195 = vrot.lane.b32.xlu0 %v1110, 64
        %v1196 = vpop.permute.xlu0 %1195
        %1197 = vrot.lane.b32.xlu0 %v1114, 64
        %v1198 = vpop.permute.xlu0 %1197
        %1199 = vrot.lane.b32.xlu0 %v1118, 64
        %v1200 = vpop.permute.xlu0 %1199
        %1201 = vrot.lane.b32.xlu0 %v1122, 64
        %v1202 = vpop.permute.xlu0 %1201
        %1219 = vrot.lane.b32.xlu0 %v1062, 32
        %v1220 = vpop.permute.xlu0 %1219
        %1221 = vrot.lane.b32.xlu0 %v1066, 32
        %v1222 = vpop.permute.xlu0 %1221
        %1223 = vrot.lane.b32.xlu0 %v1070, 32
        %v1224 = vpop.permute.xlu0 %1223
        %1225 = vrot.lane.b32.xlu0 %v1074, 32
        %v1226 = vpop.permute.xlu0 %1225
        %1227 = vrot.lane.b32.xlu0 %v1078, 32
        %v1228 = vpop.permute.xlu0 %1227
        %1229 = vrot.lane.b32.xlu0 %v1082, 32
        %v1230 = vpop.permute.xlu0 %1229
        %1231 = vrot.lane.b32.xlu0 %v1086, 32
        %v1232 = vpop.permute.xlu0 %1231
        %1233 = vrot.lane.b32.xlu0 %v1090, 32
        %v1234 = vpop.permute.xlu0 %1233
        %1235 = vrot.lane.b32.xlu0 %v1094, 32
        %v1236 = vpop.permute.xlu0 %1235
        %1237 = vrot.lane.b32.xlu0 %v1098, 32
        %v1238 = vpop.permute.xlu0 %1237
        %1239 = vrot.lane.b32.xlu0 %v1102, 32
        %v1240 = vpop.permute.xlu0 %1239
        %1241 = vrot.lane.b32.xlu0 %v1106, 32
        %v1242 = vpop.permute.xlu0 %1241
        %1243 = vrot.lane.b32.xlu0 %v1110, 32
        %v1244 = vpop.permute.xlu0 %1243
        %1245 = vrot.lane.b32.xlu0 %v1114, 32
        %v1246 = vpop.permute.xlu0 %1245
        %1247 = vrot.lane.b32.xlu0 %v1118, 32
        %v1248 = vpop.permute.xlu0 %1247
        %1249 = vrot.lane.b32.xlu0 %v1122, 32
        %v1250 = vpop.permute.xlu0 %1249
        %v1267 = vlaneseq
        %v1268 = vshrl.u32 %v1267, 7
        %v1269 = vsub.s32 0, %v1268
        %v1270 = vrot.slane %v984, %v1269
        %v1271 = vlaneseq
        %v1272 = vshrl.u32 %v1271, 7
        %v1273 = vsub.s32 0, %v1272
        %v1274 = vrot.slane %v998, %v1273
        %v1275 = vlaneseq
        %v1276 = vshrl.u32 %v1275, 7
        %v1277 = vsub.s32 0, %v1276
        %v1278 = vrot.slane %v1006, %v1277
        %v1279 = vlaneseq
        %v1280 = vshrl.u32 %v1279, 7
        %v1281 = vsub.s32 0, %v1280
        %v1282 = vrot.slane %v1008, %v1281
        %v1283 = vlaneseq
        %v1284 = vshrl.u32 %v1283, 7
        %v1285 = vsub.s32 0, %v1284
        %v1286 = vrot.slane %v991, %v1285
        %v1287 = vlaneseq
        %v1288 = vshrl.u32 %v1287, 7
        %v1289 = vsub.s32 0, %v1288
        %v1290 = vrot.slane %v1005, %v1289
        %v1291 = vlaneseq
        %v1292 = vshrl.u32 %v1291, 7
        %v1293 = vsub.s32 0, %v1292
        %v1294 = vrot.slane %v1007, %v1293
        %v1295 = vlaneseq
        %v1296 = vshrl.u32 %v1295, 7
        %v1297 = vsub.s32 0, %v1296
        %v1298 = vrot.slane %v1009, %v1297
        %v1299 = vlaneseq
        %v1300 = vshrl.u32 %v1299, 7
        %v1301 = vsub.s32 0, %v1300
        %v1302 = vrot.slane %v1033, %v1301
        %v1303 = vlaneseq
        %v1304 = vshrl.u32 %v1303, 7
        %v1305 = vsub.s32 0, %v1304
        %v1306 = vrot.slane %v1047, %v1305
        %v1307 = vlaneseq
        %v1308 = vshrl.u32 %v1307, 7
        %v1309 = vsub.s32 0, %v1308
        %v1310 = vrot.slane %v1055, %v1309
        %v1311 = vlaneseq
        %v1312 = vshrl.u32 %v1311, 7
        %v1313 = vsub.s32 0, %v1312
        %v1314 = vrot.slane %v1057, %v1313
        %v1315 = vlaneseq
        %v1316 = vshrl.u32 %v1315, 7
        %v1317 = vsub.s32 0, %v1316
        %v1318 = vrot.slane %v1040, %v1317
        %v1319 = vlaneseq
        %v1320 = vshrl.u32 %v1319, 7
        %v1321 = vsub.s32 0, %v1320
        %v1322 = vrot.slane %v1054, %v1321
        %v1323 = vlaneseq
        %v1324 = vshrl.u32 %v1323, 7
        %v1325 = vsub.s32 0, %v1324
        %v1326 = vrot.slane %v1056, %v1325
        %v1327 = vlaneseq
        %v1328 = vshrl.u32 %v1327, 7
        %v1329 = vsub.s32 0, %v1328
        %v1330 = vrot.slane %v1058, %v1329
        %1347 = vrot.lane.b32.xlu0 %v1270, 96
        %v1348 = vpop.permute.xlu0 %1347
        %1349 = vrot.lane.b32.xlu0 %v1274, 96
        %v1350 = vpop.permute.xlu0 %1349
        %1351 = vrot.lane.b32.xlu0 %v1278, 96
        %v1352 = vpop.permute.xlu0 %1351
        %1353 = vrot.lane.b32.xlu0 %v1282, 96
        %v1354 = vpop.permute.xlu0 %1353
        %1355 = vrot.lane.b32.xlu0 %v1286, 96
        %v1356 = vpop.permute.xlu0 %1355
        %1357 = vrot.lane.b32.xlu0 %v1290, 96
        %v1358 = vpop.permute.xlu0 %1357
        %1359 = vrot.lane.b32.xlu0 %v1294, 96
        %v1360 = vpop.permute.xlu0 %1359
        %1361 = vrot.lane.b32.xlu0 %v1298, 96
        %v1362 = vpop.permute.xlu0 %1361
        %1363 = vrot.lane.b32.xlu0 %v1302, 96
        %v1364 = vpop.permute.xlu0 %1363
        %1365 = vrot.lane.b32.xlu0 %v1306, 96
        %v1366 = vpop.permute.xlu0 %1365
        %1367 = vrot.lane.b32.xlu0 %v1310, 96
        %v1368 = vpop.permute.xlu0 %1367
        %1369 = vrot.lane.b32.xlu0 %v1314, 96
        %v1370 = vpop.permute.xlu0 %1369
        %1371 = vrot.lane.b32.xlu0 %v1318, 96
        %v1372 = vpop.permute.xlu0 %1371
        %1373 = vrot.lane.b32.xlu0 %v1322, 96
        %v1374 = vpop.permute.xlu0 %1373
        %1375 = vrot.lane.b32.xlu0 %v1326, 96
        %v1376 = vpop.permute.xlu0 %1375
        %1377 = vrot.lane.b32.xlu0 %v1330, 96
        %v1378 = vpop.permute.xlu0 %1377
        %1395 = vrot.lane.b32.xlu0 %v1270, 64
        %v1396 = vpop.permute.xlu0 %1395
        %1397 = vrot.lane.b32.xlu0 %v1274, 64
        %v1398 = vpop.permute.xlu0 %1397
        %1399 = vrot.lane.b32.xlu0 %v1278, 64
        %v1400 = vpop.permute.xlu0 %1399
        %1401 = vrot.lane.b32.xlu0 %v1282, 64
        %v1402 = vpop.permute.xlu0 %1401
        %1403 = vrot.lane.b32.xlu0 %v1286, 64
        %v1404 = vpop.permute.xlu0 %1403
        %1405 = vrot.lane.b32.xlu0 %v1290, 64
        %v1406 = vpop.permute.xlu0 %1405
        %1407 = vrot.lane.b32.xlu0 %v1294, 64
        %v1408 = vpop.permute.xlu0 %1407
        %1409 = vrot.lane.b32.xlu0 %v1298, 64
        %v1410 = vpop.permute.xlu0 %1409
        %1411 = vrot.lane.b32.xlu0 %v1302, 64
        %v1412 = vpop.permute.xlu0 %1411
        %1413 = vrot.lane.b32.xlu0 %v1306, 64
        %v1414 = vpop.permute.xlu0 %1413
        %1415 = vrot.lane.b32.xlu0 %v1310, 64
        %v1416 = vpop.permute.xlu0 %1415
        %1417 = vrot.lane.b32.xlu0 %v1314, 64
        %v1418 = vpop.permute.xlu0 %1417
        %1419 = vrot.lane.b32.xlu0 %v1318, 64
        %v1420 = vpop.permute.xlu0 %1419
        %1421 = vrot.lane.b32.xlu0 %v1322, 64
        %v1422 = vpop.permute.xlu0 %1421
        %1423 = vrot.lane.b32.xlu0 %v1326, 64
        %v1424 = vpop.permute.xlu0 %1423
        %1425 = vrot.lane.b32.xlu0 %v1330, 64
        %v1426 = vpop.permute.xlu0 %1425
        %1443 = vrot.lane.b32.xlu0 %v1270, 32
        %v1444 = vpop.permute.xlu0 %1443
        %1445 = vrot.lane.b32.xlu0 %v1274, 32
        %v1446 = vpop.permute.xlu0 %1445
        %1447 = vrot.lane.b32.xlu0 %v1278, 32
        %v1448 = vpop.permute.xlu0 %1447
        %1449 = vrot.lane.b32.xlu0 %v1282, 32
        %v1450 = vpop.permute.xlu0 %1449
        %1451 = vrot.lane.b32.xlu0 %v1286, 32
        %v1452 = vpop.permute.xlu0 %1451
        %1453 = vrot.lane.b32.xlu0 %v1290, 32
        %v1454 = vpop.permute.xlu0 %1453
        %1455 = vrot.lane.b32.xlu0 %v1294, 32
        %v1456 = vpop.permute.xlu0 %1455
        %1457 = vrot.lane.b32.xlu0 %v1298, 32
        %v1458 = vpop.permute.xlu0 %1457
        %1459 = vrot.lane.b32.xlu0 %v1302, 32
        %v1460 = vpop.permute.xlu0 %1459
        %1461 = vrot.lane.b32.xlu0 %v1306, 32
        %v1462 = vpop.permute.xlu0 %1461
        %1463 = vrot.lane.b32.xlu0 %v1310, 32
        %v1464 = vpop.permute.xlu0 %1463
        %1465 = vrot.lane.b32.xlu0 %v1314, 32
        %v1466 = vpop.permute.xlu0 %1465
        %1467 = vrot.lane.b32.xlu0 %v1318, 32
        %v1468 = vpop.permute.xlu0 %1467
        %1469 = vrot.lane.b32.xlu0 %v1322, 32
        %v1470 = vpop.permute.xlu0 %1469
        %1471 = vrot.lane.b32.xlu0 %v1326, 32
        %v1472 = vpop.permute.xlu0 %1471
        %1473 = vrot.lane.b32.xlu0 %v1330, 32
        %v1474 = vpop.permute.xlu0 %1473
        %vm1491 = vcmask 1040384
        %v1492 = vsel %vm1491, %v868, %v1124
        %v1493 = vsel %vm1491, %v882, %v1126
        %v1494 = vsel %vm1491, %v890, %v1128
        %v1495 = vsel %vm1491, %v892, %v1130
        %v1496 = vsel %vm1491, %v875, %v1132
        %v1497 = vsel %vm1491, %v889, %v1134
        %v1498 = vsel %vm1491, %v891, %v1136
        %v1499 = vsel %vm1491, %v893, %v1138
        %v1500 = vsel %vm1491, %v917, %v1140
        %v1501 = vsel %vm1491, %v931, %v1142
        %v1502 = vsel %vm1491, %v939, %v1144
        %v1503 = vsel %vm1491, %v941, %v1146
        %v1504 = vsel %vm1491, %v924, %v1148
        %v1505 = vsel %vm1491, %v938, %v1150
        %v1506 = vsel %vm1491, %v940, %v1152
        %v1507 = vsel %vm1491, %v942, %v1154
        %vm1508 = vcmask 1041408
        %v1509 = vsel %vm1508, %v1492, %v1172
        %v1510 = vsel %vm1508, %v1493, %v1174
        %v1511 = vsel %vm1508, %v1494, %v1176
        %v1512 = vsel %vm1508, %v1495, %v1178
        %v1513 = vsel %vm1508, %v1496, %v1180
        %v1514 = vsel %vm1508, %v1497, %v1182
        %v1515 = vsel %vm1508, %v1498, %v1184
        %v1516 = vsel %vm1508, %v1499, %v1186
        %v1517 = vsel %vm1508, %v1500, %v1188
        %v1518 = vsel %vm1508, %v1501, %v1190
        %v1519 = vsel %vm1508, %v1502, %v1192
        %v1520 = vsel %vm1508, %v1503, %v1194
        %v1521 = vsel %vm1508, %v1504, %v1196
        %v1522 = vsel %vm1508, %v1505, %v1198
        %v1523 = vsel %vm1508, %v1506, %v1200
        %v1524 = vsel %vm1508, %v1507, %v1202
        %vm1525 = vcmask 1042432
        %v1526 = vsel %vm1525, %v1509, %v1220
        %v1527 = vsel %vm1525, %v1510, %v1222
        %v1528 = vsel %vm1525, %v1511, %v1224
        %v1529 = vsel %vm1525, %v1512, %v1226
        %v1530 = vsel %vm1525, %v1513, %v1228
        %v1531 = vsel %vm1525, %v1514, %v1230
        %v1532 = vsel %vm1525, %v1515, %v1232
        %v1533 = vsel %vm1525, %v1516, %v1234
        %v1534 = vsel %vm1525, %v1517, %v1236
        %v1535 = vsel %vm1525, %v1518, %v1238
        %v1536 = vsel %vm1525, %v1519, %v1240
        %v1537 = vsel %vm1525, %v1520, %v1242
        %v1538 = vsel %vm1525, %v1521, %v1244
        %v1539 = vsel %vm1525, %v1522, %v1246
        %v1540 = vsel %vm1525, %v1523, %v1248
        %v1541 = vsel %vm1525, %v1524, %v1250
        %v1542 = vsel %vm339, %v1526, %v1270
        %v1543 = vsel %vm339, %v1527, %v1274
        %v1544 = vsel %vm339, %v1528, %v1278
        %v1545 = vsel %vm339, %v1529, %v1282
        %v1546 = vsel %vm339, %v1530, %v1286
        %v1547 = vsel %vm339, %v1531, %v1290
        %v1548 = vsel %vm339, %v1532, %v1294
        %v1549 = vsel %vm339, %v1533, %v1298
        %v1550 = vsel %vm339, %v1534, %v1302
        %v1551 = vsel %vm339, %v1535, %v1306
        %v1552 = vsel %vm339, %v1536, %v1310
        %v1553 = vsel %vm339, %v1537, %v1314
        %v1554 = vsel %vm339, %v1538, %v1318
        %v1555 = vsel %vm339, %v1539, %v1322
        %v1556 = vsel %vm339, %v1540, %v1326
        %v1557 = vsel %vm339, %v1541, %v1330
        %vm1558 = vcmask 1044480
        %v1559 = vsel %vm1558, %v1542, %v1348
        %v1560 = vsel %vm1558, %v1543, %v1350
        %v1561 = vsel %vm1558, %v1544, %v1352
        %v1562 = vsel %vm1558, %v1545, %v1354
        %v1563 = vsel %vm1558, %v1546, %v1356
        %v1564 = vsel %vm1558, %v1547, %v1358
        %v1565 = vsel %vm1558, %v1548, %v1360
        %v1566 = vsel %vm1558, %v1549, %v1362
        %v1567 = vsel %vm1558, %v1550, %v1364
        %v1568 = vsel %vm1558, %v1551, %v1366
        %v1569 = vsel %vm1558, %v1552, %v1368
        %v1570 = vsel %vm1558, %v1553, %v1370
        %v1571 = vsel %vm1558, %v1554, %v1372
        %v1572 = vsel %vm1558, %v1555, %v1374
        %v1573 = vsel %vm1558, %v1556, %v1376
        %v1574 = vsel %vm1558, %v1557, %v1378
        %vm1575 = vcmask 1045504
        %v1576 = vsel %vm1575, %v1559, %v1396
        %v1577 = vsel %vm1575, %v1560, %v1398
        %v1578 = vsel %vm1575, %v1561, %v1400
        %v1579 = vsel %vm1575, %v1562, %v1402
        %v1580 = vsel %vm1575, %v1563, %v1404
        %v1581 = vsel %vm1575, %v1564, %v1406
        %v1582 = vsel %vm1575, %v1565, %v1408
        %v1583 = vsel %vm1575, %v1566, %v1410
        %v1584 = vsel %vm1575, %v1567, %v1412
        %v1585 = vsel %vm1575, %v1568, %v1414
        %v1586 = vsel %vm1575, %v1569, %v1416
        %v1587 = vsel %vm1575, %v1570, %v1418
        %v1588 = vsel %vm1575, %v1571, %v1420
        %v1589 = vsel %vm1575, %v1572, %v1422
        %v1590 = vsel %vm1575, %v1573, %v1424
        %v1591 = vsel %vm1575, %v1574, %v1426
        %vm1592 = vcmask 1046528
        %v1593 = vsel %vm1592, %v1576, %v1444
        %v1594 = vsel %vm1592, %v1577, %v1446
        %v1595 = vsel %vm1592, %v1578, %v1448
        %v1596 = vsel %vm1592, %v1579, %v1450
        %v1597 = vsel %vm1592, %v1580, %v1452
        %v1598 = vsel %vm1592, %v1581, %v1454
        %v1599 = vsel %vm1592, %v1582, %v1456
        %v1600 = vsel %vm1592, %v1583, %v1458
        %v1601 = vsel %vm1592, %v1584, %v1460
        %v1602 = vsel %vm1592, %v1585, %v1462
        %v1603 = vsel %vm1592, %v1586, %v1464
        %v1604 = vsel %vm1592, %v1587, %v1466
        %v1605 = vsel %vm1592, %v1588, %v1468
        %v1606 = vsel %vm1592, %v1589, %v1470
        %v1607 = vsel %vm1592, %v1590, %v1472
        %v1608 = vsel %vm1592, %v1591, %v1474
        %v1609 = vld [vmem:[%s8] sm:$0xff]
        %v1610 = vld [vmem:[%s8 + $0x8] sm:$0xff]
        %vm1611 = vcmask 130048
        %v1613 = vsel %vm1611, %v1593, 0
        %v1616 = vsel %vm1611, %v1594, 0
        %v1619 = vsel %vm1611, %v1595, 0
        %v1622 = vsel %vm1611, %v1596, 0
        %v1625 = vsel %vm1611, %v1597, 0
        %v1628 = vsel %vm1611, %v1598, 0
        %v1631 = vsel %vm1611, %v1599, 0
        %v1634 = vsel %vm1611, %v1600, 0
        %v1637 = vsel %vm1611, %v1601, 0
        %v1640 = vsel %vm1611, %v1602, 0
        %v1643 = vsel %vm1611, %v1603, 0
        %v1646 = vsel %vm1611, %v1604, 0
        %v1649 = vsel %vm1611, %v1605, 0
        %v1652 = vsel %vm1611, %v1606, 0
        %v1655 = vsel %vm1611, %v1607, 0
        %v1658 = vsel %vm1611, %v1608, 0
        %1660 = vmatprep.subr.mxu0 0.0
        %1661 = vmatpush1.msra.mxu0 %v1609
        %1662 = vmatprep.subr.mxu0 0.0
        %1663 = vmatpush1.msra.mxu0 %v1610
        %1664 = vmatprep.subr.mxu0 0.0
        %1665 = vmatpush1.msra.mxu0 0.0
        %1666 = vmatprep.subr.mxu0 0.0
        %1667 = vmatpush1.msra.mxu0 0.0
        %1668 = vmatprep.subr.mxu0 0.0
        %1669 = vmatpush1.msra.mxu0 0.0
        %1670 = vmatprep.subr.mxu0 0.0
        %1671 = vmatpush1.msra.mxu0 0.0
        %1672 = vmatprep.subr.mxu0 0.0
        %1673 = vmatpush1.msra.mxu0 0.0
        %1674 = vmatprep.subr.mxu0 0.0
        %1675 = vmatpush1.msra.mxu0 0.0
        %1676 = vmatprep.subr.mxu0 0.0
        %1677 = vmatpush1.msra.mxu0 0.0
        %1678 = vmatprep.subr.mxu0 0.0
        %1679 = vmatpush1.msra.mxu0 0.0
        %1680 = vmatprep.subr.mxu0 0.0
        %1681 = vmatpush1.msra.mxu0 0.0
        %1682 = vmatprep.subr.mxu0 0.0
        %1683 = vmatpush1.msra.mxu0 0.0
        %1684 = vmatprep.subr.mxu0 0.0
        %1685 = vmatpush1.msra.mxu0 0.0
        %1686 = vmatprep.subr.mxu0 0.0
        %1687 = vmatpush1.msra.mxu0 0.0
        %1688 = vmatprep.subr.mxu0 0.0
        %1689 = vmatpush1.msra.mxu0 0.0
        %1690 = vmatprep.subr.mxu0 0.0
        %1691 = vmatpush1.msra.mxu0 0.0
        %1692 = vmatprep.subr.mxu0 0.0
        %1693 = vmatpush1.msra.mxu0 0.0
        %1694 = vmatprep.subr.mxu0 0.0
        %1695 = vmatpush1.msra.mxu0 0.0
        %1696 = vmatprep.subr.mxu0 0.0
        %1697 = vmatpush1.msra.mxu0 0.0
        %1698 = vmatprep.subr.mxu0 0.0
        %1699 = vmatpush1.msra.mxu0 0.0
        %1700 = vmatprep.subr.mxu0 0.0
        %1701 = vmatpush1.msra.mxu0 0.0
        %1702 = vmatprep.subr.mxu0 0.0
        %1703 = vmatpush1.msra.mxu0 0.0
        %1704 = vmatprep.subr.mxu0 0.0
        %1705 = vmatpush1.msra.mxu0 0.0
        %1706 = vmatprep.subr.mxu0 0.0
        %1707 = vmatpush1.msra.mxu0 0.0
        %1708 = vmatprep.subr.mxu0 0.0
        %1709 = vmatpush1.msra.mxu0 0.0
        %1710 = vmatprep.subr.mxu0 0.0
        %1711 = vmatpush1.msra.mxu0 0.0
        %1712 = vmatprep.subr.mxu0 0.0
        %1713 = vmatpush1.msra.mxu0 0.0
        %1714 = vmatprep.subr.mxu0 0.0
        %1715 = vmatpush1.msra.mxu0 0.0
        %1716 = vmatprep.subr.mxu0 0.0
        %1717 = vmatpush1.msra.mxu0 0.0
        %1718 = vmatprep.subr.mxu0 0.0
        %1719 = vmatpush1.msra.mxu0 0.0
        %1720 = vmatprep.subr.mxu0 0.0
        %1721 = vmatpush1.msra.mxu0 0.0
        %1722 = vmatprep.subr.mxu0 0.0
        %1723 = vmatpush1.msra.mxu0 0.0
        %1724 = vmatprep.mubr.f32.mxu0 0.0
        %1725 = vmatmul.mubr.f32.gmra.mrb[0].mxu0 %v1613
        %v1726 = vpop.f32.mrb[0].mxu0
        %v1727 = vadd.f32 0.0, %v1726
        %v1728 = vpop.f32.mrb[0].mxu0
        %1729 = vmatprep.mubr.f32.mxu0 0.0
        %1730 = vmatmul.mubr.f32.gmra.mrb[0].mxu0 %v1616
        %v1731 = vpop.f32.mrb[0].mxu0
        %v1732 = vadd.f32 0.0, %v1731
        %v1733 = vpop.f32.mrb[0].mxu0
        %1734 = vmatprep.mubr.f32.mxu0 0.0
        %1735 = vmatmul.mubr.f32.gmra.mrb[0].mxu0 %v1619
        %v1736 = vpop.f32.mrb[0].mxu0
        %v1737 = vadd.f32 0.0, %v1736
        %v1738 = vpop.f32.mrb[0].mxu0
        %1739 = vmatprep.mubr.f32.mxu0 0.0
        %1740 = vmatmul.mubr.f32.gmra.mrb[0].mxu0 %v1622
        %v1741 = vpop.f32.mrb[0].mxu0
        %v1742 = vadd.f32 0.0, %v1741
        %v1743 = vpop.f32.mrb[0].mxu0
        %1744 = vmatprep.mubr.f32.mxu0 0.0
        %1745 = vmatmul.mubr.f32.gmra.mrb[0].mxu0 %v1625
        %v1746 = vpop.f32.mrb[0].mxu0
        %v1747 = vadd.f32 0.0, %v1746
        %v1748 = vpop.f32.mrb[0].mxu0
        %1749 = vmatprep.mubr.f32.mxu0 0.0
        %1750 = vmatmul.mubr.f32.gmra.mrb[0].mxu0 %v1628
        %v1751 = vpop.f32.mrb[0].mxu0
        %v1752 = vadd.f32 0.0, %v1751
        %v1753 = vpop.f32.mrb[0].mxu0
        %1754 = vmatprep.mubr.f32.mxu0 0.0
        %1755 = vmatmul.mubr.f32.gmra.mrb[0].mxu0 %v1631
        %v1756 = vpop.f32.mrb[0].mxu0
        %v1757 = vadd.f32 0.0, %v1756
        %v1758 = vpop.f32.mrb[0].mxu0
        %1759 = vmatprep.mubr.f32.mxu0 0.0
        %1760 = vmatmul.mubr.f32.gmra.mrb[0].mxu0 %v1634
        %v1761 = vpop.f32.mrb[0].mxu0
        %v1762 = vadd.f32 0.0, %v1761
        %v1763 = vpop.f32.mrb[0].mxu0
        %1764 = vmatprep.mubr.f32.mxu0 0.0
        %1765 = vmatmul.mubr.f32.gmra.mrb[0].mxu0 %v1637
        %v1766 = vpop.f32.mrb[0].mxu0
        %v1767 = vadd.f32 0.0, %v1766
        %v1768 = vpop.f32.mrb[0].mxu0
        %1769 = vmatprep.mubr.f32.mxu0 0.0
        %1770 = vmatmul.mubr.f32.gmra.mrb[0].mxu0 %v1640
        %v1771 = vpop.f32.mrb[0].mxu0
        %v1772 = vadd.f32 0.0, %v1771
        %v1773 = vpop.f32.mrb[0].mxu0
        %1774 = vmatprep.mubr.f32.mxu0 0.0
        %1775 = vmatmul.mubr.f32.gmra.mrb[0].mxu0 %v1643
        %v1776 = vpop.f32.mrb[0].mxu0
        %v1777 = vadd.f32 0.0, %v1776
        %v1778 = vpop.f32.mrb[0].mxu0
        %1779 = vmatprep.mubr.f32.mxu0 0.0
        %1780 = vmatmul.mubr.f32.gmra.mrb[0].mxu0 %v1646
        %v1781 = vpop.f32.mrb[0].mxu0
        %v1782 = vadd.f32 0.0, %v1781
        %v1783 = vpop.f32.mrb[0].mxu0
        %1784 = vmatprep.mubr.f32.mxu0 0.0
        %1785 = vmatmul.mubr.f32.gmra.mrb[0].mxu0 %v1649
        %v1786 = vpop.f32.mrb[0].mxu0
        %v1787 = vadd.f32 0.0, %v1786
        %v1788 = vpop.f32.mrb[0].mxu0
        %1789 = vmatprep.mubr.f32.mxu0 0.0
        %1790 = vmatmul.mubr.f32.gmra.mrb[0].mxu0 %v1652
        %v1791 = vpop.f32.mrb[0].mxu0
        %v1792 = vadd.f32 0.0, %v1791
        %v1793 = vpop.f32.mrb[0].mxu0
        %1794 = vmatprep.mubr.f32.mxu0 0.0
        %1795 = vmatmul.mubr.f32.gmra.mrb[0].mxu0 %v1655
        %v1796 = vpop.f32.mrb[0].mxu0
        %v1797 = vadd.f32 0.0, %v1796
        %v1798 = vpop.f32.mrb[0].mxu0
        %1799 = vmatprep.mubr.f32.mxu0 0.0
        %1800 = vmatmul.mubr.f32.gmra.mrb[0].mxu0 %v1658
        %v1801 = vpop.f32.mrb[0].mxu0
        %v1802 = vadd.f32 0.0, %v1801
        %v1803 = vpop.f32.mrb[0].mxu0
        %1804 = vdwg.mxu0
        %v1805 = vrcp.pop %v1767
        %v1806 = vrcp.pop %v1772
        %v1807 = vrcp.pop %v1777
        %v1808 = vrcp.pop %v1782
        %v1809 = vrcp.pop %v1787
        %v1810 = vrcp.pop %v1792
        %v1811 = vrcp.pop %v1797
        %v1812 = vrcp.pop %v1802
        %v1813 = vmul.f32 %v1727, %v1805
        %v1814 = vmul.f32 %v1732, %v1806
        %v1815 = vmul.f32 %v1737, %v1807
        %v1816 = vmul.f32 %v1742, %v1808
        %v1817 = vmul.f32 %v1747, %v1809
        %v1818 = vmul.f32 %v1752, %v1810
        %v1819 = vmul.f32 %v1757, %v1811
        %v1820 = vmul.f32 %v1762, %v1812
        %vm1821 = vcmask 64512
        %1822 = vst.msk [vmem:[%s322] sm:$0xff] %vm1821, %v1813
        %s1823 = scalar_lea.vmem %s322, 8 [#allocation2]
        %1824 = vst.msk [vmem:[%s1823] sm:$0xff] %vm1821, %v1814
        %s1825 = scalar_lea.vmem %s322, 16 [#allocation2]
        %1826 = vst.msk [vmem:[%s1825] sm:$0xff] %vm1821, %v1815
        %s1827 = scalar_lea.vmem %s322, 24 [#allocation2]
        %1828 = vst.msk [vmem:[%s1827] sm:$0xff] %vm1821, %v1816
        %s1829 = scalar_lea.vmem %s322, 32 [#allocation2]
        %1830 = vst.msk [vmem:[%s1829] sm:$0xff] %vm1821, %v1817
        %s1831 = scalar_lea.vmem %s322, 40 [#allocation2]
        %1832 = vst.msk [vmem:[%s1831] sm:$0xff] %vm1821, %v1818
        %s1833 = scalar_lea.vmem %s322, 48 [#allocation2]
        %1834 = vst.msk [vmem:[%s1833] sm:$0xff] %vm1821, %v1819
        %s1835 = scalar_lea.vmem %s322, 56 [#allocation2]
        %1836 = vst.msk [vmem:[%s1835] sm:$0xff] %vm1821, %v1820
        %s1837 = sand.u32 %s222, 1
        %s1838 = sand.u32 %s222, 1
        %s1839 = smul.addr %s1838, 64
        %s1840 = scalar_lea.vmem [#allocation2], %s1839
        // Predicated region
        $region57: #{tpu_custom_call.1} parent=55 // pred_check
          %p1841 = pneg %p232
        $region58: #{tpu_custom_call.1} parent=55 // pred_check_branch
          %1843 = sbr.rel (%p1841) target = $region60
        $region59: #{tpu_custom_call.1} parent=55 // pred_region
          %s1844 = smul.addr %s20, 8
          %s1845 = scalar_lea.vmem %s9, %s1844
          // Predicated region
          $region61: #{tpu_custom_call.1} parent=59 // pred_check
            _
          $region62: #{tpu_custom_call.1} parent=59 // pred_check_branch
            %1847 = sbr.rel (0) target = $region64
          $region63: #{tpu_custom_call.1} parent=59 // pred_region
            // Predicated region
            $region65: #{tpu_custom_call.1} parent=63 // pred_check
              _
            $region66: #{tpu_custom_call.1} parent=63 // pred_check_branch
              %1849 = sbr.rel (0) target = $region68
            $region67: #{tpu_custom_call.1} parent=63 // pred_region
              // Predicated region
              $region80: #{tpu_custom_call.1} parent=67 // pred_check
                _
              $region81: #{tpu_custom_call.1} parent=67 // pred_check_branch
                %1878 = sbr.rel (0) target = $region83
              $region82: #{tpu_custom_call.1} parent=67 // pred_region
                loop: start=0, step=1, limit=1
                $region84: #{tpu_custom_call.1} parent=82 // loop_pre_header
                  _
                $region85: #{tpu_custom_call.1} parent=82 // loop_header
                  %s1880 = sphi 0, %s1884
                  %p1881 = scmp.ge.s32.totalorder %s1880, 1
                  %s1885 = sphi %s1840, %s1840
                  %s1886 = sphi %s1845, %s1845
                $region86: #{tpu_custom_call.1} parent=82 // loop_header_branch
                  %1883 = sbr.rel (%p1881) target = $region90
                $region87: #{tpu_custom_call.1} parent=82 // loop_body
                  %v1887 = vld [vmem:[%s1885] sm:$0xff]
                  %1888 = vst [vmem:[%s1886] sm:$0xff] %v1887
                  %v1889 = vld [vmem:[%s1885 + $0x8] sm:$0xff]
                  %1890 = vst [vmem:[%s1886 + $0x10] sm:$0xff] %v1889
                  %v1891 = vld [vmem:[%s1885 + $0x10] sm:$0xff]
                  %1892 = vst [vmem:[%s1886 + $0x20] sm:$0xff] %v1891
                  %v1893 = vld [vmem:[%s1885 + $0x18] sm:$0xff]
                  %1894 = vst [vmem:[%s1886 + $0x30] sm:$0xff] %v1893
                  %v1895 = vld [vmem:[%s1885 + $0x20] sm:$0xff]
                  %1896 = vst [vmem:[%s1886 + $0x40] sm:$0xff] %v1895
                  %v1897 = vld [vmem:[%s1885 + $0x28] sm:$0xff]
                  %1898 = vst [vmem:[%s1886 + $0x50] sm:$0xff] %v1897
                  %v1899 = vld [vmem:[%s1885 + $0x30] sm:$0xff]
                  %1900 = vst [vmem:[%s1886 + $0x60] sm:$0xff] %v1899
                  %v1901 = vld [vmem:[%s1885 + $0x38] sm:$0xff]
                  %1902 = vst [vmem:[%s1886 + $0x70] sm:$0xff] %v1901
                $region88: #{tpu_custom_call.1} parent=82 // loop_footer
                  %s1884 = sadd.s32 1, %s1880
                $region89: #{tpu_custom_call.1} parent=82 // loop_footer_branch
                  %1879 = sbr.rel target = $region85
                $region90: #{tpu_custom_call.1} parent=82 // loop_exit
                  _
              $region83: #{tpu_custom_call.1} parent=67 // pred_fallthru
                _
              // Predicated region
              $region91: #{tpu_custom_call.1} parent=67 // pred_check
                _
              $region92: #{tpu_custom_call.1} parent=67 // pred_check_branch
                %1904 = sbr.rel target = $region94
              $region93: #{tpu_custom_call.1} parent=67 // pred_region
                _
              $region94: #{tpu_custom_call.1} parent=67 // pred_fallthru
                _
            $region68: #{tpu_custom_call.1} parent=63 // pred_fallthru
              _
            // Predicated region
            $region69: #{tpu_custom_call.1} parent=63 // pred_check
              _
            $region70: #{tpu_custom_call.1} parent=63 // pred_check_branch
              %1851 = sbr.rel target = $region72
            $region71: #{tpu_custom_call.1} parent=63 // pred_region
              loop: start=0, step=1, limit=1
              $region73: #{tpu_custom_call.1} parent=71 // loop_pre_header
                _
              $region74: #{tpu_custom_call.1} parent=71 // loop_header
                %s1854 = sphi 0, %s1858
                %p1855 = scmp.ge.s32.totalorder %s1854, 1
                %s1859 = sphi %s1840, %s1840
                %s1860 = sphi %s1845, %s1845
              $region75: #{tpu_custom_call.1} parent=71 // loop_header_branch
                %1857 = sbr.rel (%p1855) target = $region79
              $region76: #{tpu_custom_call.1} parent=71 // loop_body
                %v1861 = vld [vmem:[%s1859] sm:$0xff]
                %1862 = vst [vmem:[%s1860] sm:$0xff] %v1861
                %v1863 = vld [vmem:[%s1859 + $0x8] sm:$0xff]
                %1864 = vst [vmem:[%s1860 + $0x10] sm:$0xff] %v1863
                %v1865 = vld [vmem:[%s1859 + $0x10] sm:$0xff]
                %1866 = vst [vmem:[%s1860 + $0x20] sm:$0xff] %v1865
                %v1867 = vld [vmem:[%s1859 + $0x18] sm:$0xff]
                %1868 = vst [vmem:[%s1860 + $0x30] sm:$0xff] %v1867
                %v1869 = vld [vmem:[%s1859 + $0x20] sm:$0xff]
                %1870 = vst [vmem:[%s1860 + $0x40] sm:$0xff] %v1869
                %v1871 = vld [vmem:[%s1859 + $0x28] sm:$0xff]
                %1872 = vst [vmem:[%s1860 + $0x50] sm:$0xff] %v1871
                %v1873 = vld [vmem:[%s1859 + $0x30] sm:$0xff]
                %1874 = vst [vmem:[%s1860 + $0x60] sm:$0xff] %v1873
                %v1875 = vld [vmem:[%s1859 + $0x38] sm:$0xff]
                %1876 = vst [vmem:[%s1860 + $0x70] sm:$0xff] %v1875
              $region77: #{tpu_custom_call.1} parent=71 // loop_footer
                %s1858 = sadd.s32 1, %s1854
              $region78: #{tpu_custom_call.1} parent=71 // loop_footer_branch
                %1853 = sbr.rel target = $region74
              $region79: #{tpu_custom_call.1} parent=71 // loop_exit
                _
            $region72: #{tpu_custom_call.1} parent=63 // pred_fallthru
              _
          $region64: #{tpu_custom_call.1} parent=59 // pred_fallthru
            _
          %1905 = vnop
        $region60: #{tpu_custom_call.1} parent=55 // pred_fallthru
          _
      $region56: #{tpu_custom_call.1} parent=5 // pred_fallthru
        _
      %p1906 = scmp.le.s32.totalorder 2, %s15
      // Predicated region
      $region95: #{tpu_custom_call.1} parent=5 // pred_check
        %p1907 = pneg %p1906
      $region96: #{tpu_custom_call.1} parent=5 // pred_check_branch
        %1909 = sbr.rel (%p1907) target = $region98
      $region97: #{tpu_custom_call.1} parent=5 // pred_region
        %s1910 = ssub.s32 %s15, 2
        // Predicated region
        $region99: #{tpu_custom_call.1} parent=97 // pred_check
          %p1911 = pneg %p238
        $region100: #{tpu_custom_call.1} parent=97 // pred_check_branch
          %1913 = sbr.rel (%p1911) target = $region102
        $region101: #{tpu_custom_call.1} parent=97 // pred_region
          %s1914 = sand.u32 %s223, 1
          %s1915 = sand.u32 %s223, 1
          %s1916 = smul.addr %s1915, 64
          %s1917 = scalar_lea.vmem [#allocation2], %s1916
        $region102: #{tpu_custom_call.1} parent=97 // pred_fallthru
          _
      $region98: #{tpu_custom_call.1} parent=5 // pred_fallthru
        _
    $region6: #{tpu_custom_call.1} parent=1 // loop_footer
      %s19 = sadd.s32 1, %s15
    $region7: #{tpu_custom_call.1} parent=1 // loop_footer_branch
      %14 = sbr.rel target = $region3
    $region8: #{tpu_custom_call.1} parent=1 // loop_exit
      _

</llo_original>
